<compile_context>
chip_gen: v7x
topology: tpu7x:2x2x1
jax: 0.10.0
libtpu: 0.0.40
codegen_flags: <defaults>
</compile_context>

<pallas_src>
import jax
import jax.numpy as jnp
from jax.experimental import pallas as pl
from jax.experimental.pallas import tpu as pltpu

# ----------------------------- configuration --------------------------------
# Stand-in small dims; real model: F_IMG=25088, ADPT_HID=4096, IMG_EMB=2048,
# H_TEXT=768.  Structure (tiled K reduction, manual epilogue DMAs) is the same.
B        = 2     # batch
B_PAD    = 8     # batch padded to sublane granularity
S        = 8     # text sequence length
H_TEXT   = 128   # text hidden size        (stand-in for 768)
F_IMG    = 1024  # flattened VGG features  (stand-in for 25088)
TK       = 512   # K-tile of adapter L1 contraction (512 | 25088)
ADPT_HID = 256   # vgg_adapter hidden      (stand-in for 4096)
IMG_EMB  = 256   # vgg_adapter output      (stand-in for 2048)
HEAD_HID = 128   # MLP head hidden dim
N_SOURCE = 5
N_TYPE   = 5     # use_redundant_labels=True
EMB      = IMG_EMB + H_TEXT            # intermediate_embeddings_len
N_OUT    = 1 + N_TYPE + N_SOURCE       # 11 packed head outputs
OUT_PAD  = 128                         # lane-dense packed output width


# ------------------------------- fused kernel ---------------------------------
def _fused_kernel(img_ref, w1a_ref, b1a_ref, scl_ref,
                  w2a_hbm, b2a_ref, tok_hbm, msk_ref,
                  w1h_hbm, b1h_ref, w2h_ref, b2h_ref,
                  o_ref,
                  acc_ref, emb_ref, w2a_buf, tok_buf, w1h_buf, sem):
    """Whole forward pass; grid axis 0 tiles the adapter's F_IMG contraction."""
    k = pl.program_id(0)
    nk = pl.num_programs(0)

    hbm_srcs = (w2a_hbm, tok_hbm, w1h_hbm)
    vmem_dsts = (w2a_buf, tok_buf, w1h_buf)

    # --- step 0: init accumulator with folded bias, kick off background DMAs --
    @pl.when(k == 0)
    def _():
        # b1a was pre-divided by the per-channel int8 scale, so after the final
        # acc*scale the bias is recovered exactly: (x@Wq + b/s) * s = x@Wq*s + b.
        acc_ref[...] = jnp.broadcast_to(b1a_ref[...], acc_ref.shape)
        # Epilogue-only operands: single-buffered background copies that overlap
        # the K loop instead of stalling its prologue.
        for i, (src, dst) in enumerate(zip(hbm_srcs, vmem_dsts)):
            pltpu.make_async_copy(src, dst, sem.at[i]).start()

    # --- adapter first layer: int8 weights, bf16 activations, f32 accumulator --
    acc_ref[...] += jnp.dot(img_ref[...], w1a_ref[...].astype(jnp.bfloat16),
                            preferred_element_type=jnp.float32)

    # --- finalize: adapter L2, text pooling, fused concat, merged heads --------
    @pl.when(k == nk - 1)
    def _():
        for i, (src, dst) in enumerate(zip(hbm_srcs, vmem_dsts)):
            pltpu.make_async_copy(src, dst, sem.at[i]).wait()

        # vgg_adapter: relu(x@W1 + b1) @ W2 + b2   (bias already folded into acc)
        h = jnp.maximum(acc_ref[...] * scl_ref[...], 0.0)
        img_emb = jnp.dot(h.astype(jnp.bfloat16), w2a_buf[...],
                          preferred_element_type=jnp.float32) + b2a_ref[...]

        # text_mean_pooling + F.normalize(p=2, dim=1), in float32
        tok = tok_buf[...].astype(jnp.float32)                     # (B, S, H)
        msk = msk_ref[...][:, :, None]                             # (B, S, 1)
        summed = jnp.sum(tok * msk, axis=1)                        # (B, H)
        denom = jnp.maximum(jnp.sum(msk, axis=1), 1e-9)            # clamp(min=1e-9)
        pooled = summed / denom
        sumsq = jnp.sum(pooled * pooled, axis=1, keepdims=True)
        # rsqrt on the EUP; eps^2 matches F.normalize's eps=1e-12 on the norm.
        sent = pooled * jax.lax.rsqrt(jnp.maximum(sumsq, 1e-24))   # (B, H_TEXT)

        # torch.cat((image, text), 1) -> disjoint column ranges of VMEM scratch
        emb_ref[:, :IMG_EMB] = img_emb
        emb_ref[:, IMG_EMB:] = sent
        overall = emb_ref[...].astype(jnp.bfloat16)                # (B, EMB)

        # merged heads: one stacked first-layer matmul + one block-diag second
        hh = jnp.maximum(
            jnp.dot(overall, w1h_buf[...], preferred_element_type=jnp.float32)
            + b1h_ref[...], 0.0)                                   # (B, 3*HEAD_HID)
        y = jnp.dot(hh.astype(jnp.bfloat16), w2h_ref[...],
                    preferred_element_type=jnp.float32) + b2h_ref[...]
        o_ref[...] = y.astype(o_ref.dtype)                         # (B, OUT_PAD)


# ------------------------------ fused wrapper ----------------------------------
def fused_forward_pallas(p, token_embeddings, attention_mask, vgg_features):
    nk = F_IMG // TK
    flops = 2 * B_PAD * (F_IMG * ADPT_HID + ADPT_HID * IMG_EMB
                         + EMB * 3 * HEAD_HID + 3 * HEAD_HID * OUT_PAD)
    bytes_accessed = (
        vgg_features.size * 2 + token_embeddings.size * 2 + attention_mask.size * 4
        + p["w1a"].size * 1 + p["w2a"].size * 2 + p["w1h"].size * 2 + p["w2h"].size * 2
        + (p["b1a"].size + p["scl"].size + p["b2a"].size
           + p["b1h"].size + p["b2h"].size) * 4
        + B_PAD * OUT_PAD * 4)

    grid_spec = pltpu.PrefetchScalarGridSpec(
        num_scalar_prefetch=0,
        grid=(nk,),
        in_specs=[
            pl.BlockSpec((B_PAD, TK),             lambda k: (0, k)),   # vgg feats (bf16)
            pl.BlockSpec((TK, ADPT_HID),          lambda k: (k, 0)),   # adapter W1 (int8)
            pl.BlockSpec((1, ADPT_HID),           lambda k: (0, 0)),   # b1a / scale
            pl.BlockSpec((1, ADPT_HID),           lambda k: (0, 0)),   # per-ch scale
            pl.BlockSpec(memory_space=pl.ANY),                         # adapter W2 (HBM)
            pl.BlockSpec((1, IMG_EMB),            lambda k: (0, 0)),   # adapter b2
            pl.BlockSpec(memory_space=pl.ANY),                         # tokens (HBM)
            pl.BlockSpec((B_PAD, S),              lambda k: (0, 0)),   # mask
            pl.BlockSpec(memory_space=pl.ANY),                         # heads W1 (HBM)
            pl.BlockSpec((1, 3 * HEAD_HID),       lambda k: (0, 0)),   # heads b1
            pl.BlockSpec((3 * HEAD_HID, OUT_PAD), lambda k: (0, 0)),   # heads W2 (blkdiag)
            pl.BlockSpec((1, OUT_PAD),            lambda k: (0, 0)),   # heads b2
        ],
        out_specs=pl.BlockSpec((B_PAD, OUT_PAD), lambda k: (0, 0)),
        scratch_shapes=[
            pltpu.VMEM((B_PAD, ADPT_HID), jnp.float32),       # adapter-L1 accumulator
            pltpu.VMEM((B_PAD, EMB), jnp.float32),            # fused concat embedding
            pltpu.VMEM((ADPT_HID, IMG_EMB), jnp.bfloat16),    # adapter W2 landing buf
            pltpu.VMEM((B_PAD, S, H_TEXT), jnp.bfloat16),     # token embeddings buf
            pltpu.VMEM((EMB, 3 * HEAD_HID), jnp.bfloat16),    # stacked head W1 buf
            pltpu.SemaphoreType.DMA((3,)),                    # background-copy sems
        ],
    )

    return pl.pallas_call(
        _fused_kernel,
        out_shape=jax.ShapeDtypeStruct((B_PAD, OUT_PAD), jnp.float32),
        grid_spec=grid_spec,
        compiler_params=pltpu.CompilerParams(
            dimension_semantics=("arbitrary",),   # K-reduction axis
            vmem_limit_bytes=48 << 20,            # headroom on v7x (64 MiB/TC)
        ),
        cost_estimate=pl.CostEstimate(
            flops=flops, transcendentals=B_PAD, bytes_accessed=bytes_accessed),
    )(vgg_features, p["w1a"], p["b1a"], p["scl"],
      p["w2a"], p["b2a"],
      token_embeddings, attention_mask,
      p["w1h"], p["b1h"], p["w2h"], p["b2h"])


# ------------------------ parameter init + packing ----------------------------
def _init_linear(key, fan_in, fan_out):
    kw, kb = jax.random.split(key)
    bound = 1.0 / jnp.sqrt(fan_in)
    w = jax.random.uniform(kw, (fan_in, fan_out), jnp.float32, -bound, bound)
    b = jax.random.uniform(kb, (1, fan_out), jnp.float32, -bound, bound)
    return w, b


def init_params(key):
    ks = jax.random.split(key, 8)
    return {
        "vgg_adapter": (*_init_linear(ks[0], F_IMG, ADPT_HID),
                        *_init_linear(ks[1], ADPT_HID, IMG_EMB)),
        "binary":      (*_init_linear(ks[2], EMB, HEAD_HID),
                        *_init_linear(ks[3], HEAD_HID, 1)),
        "multilabel":  (*_init_linear(ks[4], EMB, HEAD_HID),
                        *_init_linear(ks[5], HEAD_HID, N_TYPE)),
        "source":      (*_init_linear(ks[6], EMB, HEAD_HID),
                        *_init_linear(ks[7], HEAD_HID, N_SOURCE)),
    }


def pack_params(raw):
    """int8 W1 (per-out-channel scale), bf16 weights elsewhere, stacked head-L1,
    block-diagonal padded head-L2."""
    w1a, b1a, w2a, b2a = raw["vgg_adapter"]
    bw1, bb1, bw2, bb2 = raw["binary"]
    mw1, mb1, mw2, mb2 = raw["multilabel"]
    sw1, sb1, sw2, sb2 = raw["source"]

    # per-output-channel int8 quantization of the dominant HBM stream (W1)
    scl = jnp.maximum(jnp.max(jnp.abs(w1a), axis=0, keepdims=True), 1e-8) / 127.0
    w1a_q = jnp.clip(jnp.round(w1a / scl), -127.0, 127.0).astype(jnp.int8)
    b1a_fold = b1a / scl                                      # folded into acc init

    w1h = jnp.concatenate([bw1, mw1, sw1], axis=1)            # (EMB, 3*HEAD_HID)
    b1h = jnp.concatenate([bb1, mb1, sb1], axis=1)            # (1, 3*HEAD_HID)

    w2h = jnp.zeros((3 * HEAD_HID, OUT_PAD), jnp.float32)
    w2h = w2h.at[0 * HEAD_HID:1 * HEAD_HID, 0:1].set(bw2)
    w2h = w2h.at[1 * HEAD_HID:2 * HEAD_HID, 1:1 + N_TYPE].set(mw2)
    w2h = w2h.at[2 * HEAD_HID:3 * HEAD_HID, 1 + N_TYPE:N_OUT].set(sw2)
    b2h = jnp.zeros((1, OUT_PAD), jnp.float32)
    b2h = b2h.at[:, 0:1].set(bb2)
    b2h = b2h.at[:, 1:1 + N_TYPE].set(mb2)
    b2h = b2h.at[:, 1 + N_TYPE:N_OUT].set(sb2)

    return {
        "w1a": w1a_q, "b1a": b1a_fold, "scl": scl,
        "w2a": w2a.astype(jnp.bfloat16), "b2a": b2a,
        "w1h": w1h.astype(jnp.bfloat16), "b1h": b1h,
        "w2h": w2h.astype(jnp.bfloat16), "b2h": b2h,
    }


# ------------------------------- forward --------------------------------------
def baseline_model_forward(packed, token_embeddings, attention_mask, vgg_features):
    b = vgg_features.shape[0]
    pad = B_PAD - b
    tok_p = jnp.pad(token_embeddings, ((0, pad), (0, 0), (0, 0))).astype(jnp.bfloat16)
    msk_p = jnp.pad(attention_mask, ((0, pad), (0, 0))).astype(jnp.float32)
    img_p = jnp.pad(vgg_features, ((0, pad), (0, 0))).astype(jnp.bfloat16)

    out = fused_forward_pallas(packed, tok_p, msk_p, img_p)[:b]   # (B, OUT_PAD)
    binary_pred     = out[:, 0:1]
    multilabel_pred = out[:, 1:1 + N_TYPE]
    source_pred     = out[:, 1 + N_TYPE:N_OUT]
    return binary_pred, multilabel_pred, source_pred


# --------------------------------- main ----------------------------------------
if __name__ == "__main__":
    key = jax.random.PRNGKey(0)
    k_par, k_tok, k_img = jax.random.split(key, 3)

    params = pack_params(init_params(k_par))

    # synthetic backbone outputs (deterministic)
    token_embeddings = jax.random.normal(k_tok, (B, S, H_TEXT), jnp.float32)
    lengths = jnp.array([6, 8], dtype=jnp.int32)       # valid-token counts
    attention_mask = (jnp.arange(S)[None, :] < lengths[:, None]).astype(jnp.float32)
    vgg_features = jax.random.normal(k_img, (B, F_IMG), jnp.float32)

    fwd = jax.jit(baseline_model_forward)
    binary_pred, multilabel_pred, source_pred = fwd(
        params, token_embeddings, attention_mask, vgg_features)
    jax.block_until_ready((binary_pred, multilabel_pred, source_pred))

    assert binary_pred.shape == (B, 1)
    assert multilabel_pred.shape == (B, N_TYPE)
    assert source_pred.shape == (B, N_SOURCE)
    assert bool(jnp.all(jnp.isfinite(binary_pred)))
    assert bool(jnp.all(jnp.isfinite(multilabel_pred)))
    assert bool(jnp.all(jnp.isfinite(source_pred)))
    print("KERNEL_OK")
</pallas_src>

<mosaic_0001>
module attributes {stable_mosaic.version = 11 : i64} {
  func.func @_fused_kernel(%arg0: i32, %arg1: memref<8x512xbf16, #tpu.memory_space<vmem>>, %arg2: memref<512x256xi8, #tpu.memory_space<vmem>>, %arg3: memref<1x256xf32, #tpu.memory_space<vmem>>, %arg4: memref<1x256xf32, #tpu.memory_space<vmem>>, %arg5: memref<256x256xbf16, #tpu.memory_space<any>>, %arg6: memref<1x256xf32, #tpu.memory_space<vmem>>, %arg7: memref<8x8x128xbf16, #tpu.memory_space<any>>, %arg8: memref<8x8xf32, #tpu.memory_space<vmem>>, %arg9: memref<384x384xbf16, #tpu.memory_space<any>>, %arg10: memref<1x384xf32, #tpu.memory_space<vmem>>, %arg11: memref<384x128xbf16, #tpu.memory_space<vmem>>, %arg12: memref<1x128xf32, #tpu.memory_space<vmem>>, %arg13: memref<8x128xf32, #tpu.memory_space<vmem>>, %arg14: memref<8x256xf32, #tpu.memory_space<vmem>>, %arg15: memref<8x384xf32, #tpu.memory_space<vmem>>, %arg16: memref<256x256xbf16, #tpu.memory_space<vmem>>, %arg17: memref<8x8x128xbf16, #tpu.memory_space<vmem>>, %arg18: memref<384x384xbf16, #tpu.memory_space<vmem>>, %arg19: memref<3x!tpu.dma_semaphore, #tpu.memory_space<semaphore_mem>>) attributes {dimension_semantics = [#tpu.dimension_semantics<arbitrary>], iteration_bounds = array<i64: 2>, scalar_prefetch = 0 : i64, scratch_operands = 6 : i64, tpu.core_type = #tpu.core_type<tc>, window_params = [{transform_indices = @transform_0, window_bounds = array<i64: 8, 512>}, {transform_indices = @transform_1, window_bounds = array<i64: 512, 256>}, {pipeline_mode = #tpu.pipeline_mode<synchronous>, transform_indices = @transform_2, window_bounds = array<i64: 1, 256>}, {pipeline_mode = #tpu.pipeline_mode<synchronous>, transform_indices = @transform_3, window_bounds = array<i64: 1, 256>}, {}, {pipeline_mode = #tpu.pipeline_mode<synchronous>, transform_indices = @transform_5, window_bounds = array<i64: 1, 256>}, {}, {pipeline_mode = #tpu.pipeline_mode<synchronous>, transform_indices = @transform_7, window_bounds = array<i64: 8, 8>}, {}, {pipeline_mode = #tpu.pipeline_mode<synchronous>, transform_indices = @transform_9, window_bounds = array<i64: 1, 384>}, {pipeline_mode = #tpu.pipeline_mode<synchronous>, transform_indices = @transform_10, window_bounds = array<i64: 384, 128>}, {pipeline_mode = #tpu.pipeline_mode<synchronous>, transform_indices = @transform_11, window_bounds = array<i64: 1, 128>}, {pipeline_mode = #tpu.pipeline_mode<synchronous>, transform_indices = @transform_12, window_bounds = array<i64: 8, 128>}]} {
    %c0_i32 = arith.constant 0 : i32
    %0 = arith.cmpi eq, %arg0, %c0_i32 : i32
    %1 = arith.extui %0 : i1 to i32
    %c0_i32_0 = arith.constant 0 : i32
    %2 = arith.cmpi ne, %1, %c0_i32_0 : i32
    scf.if %2 {
      %c0_9 = arith.constant 0 : index
      %c0_10 = arith.constant 0 : index
      %13 = vector.load %arg3[%c0_9, %c0_10] : memref<1x256xf32, #tpu.memory_space<vmem>>, vector<1x256xf32>
      %14 = vector.shape_cast %13 : vector<1x256xf32> to vector<1x256xf32>
      %15 = vector.broadcast %14 : vector<1x256xf32> to vector<8x256xf32>
      %c0_11 = arith.constant 0 : index
      %c0_12 = arith.constant 0 : index
      %16 = vector.load %arg14[%c0_11, %c0_12] : memref<8x256xf32, #tpu.memory_space<vmem>>, vector<8x256xf32>
      tpu.vector_store %arg14[%c0_11, %c0_12], %15 {strides = array<i32>} : memref<8x256xf32, #tpu.memory_space<vmem>>, vector<8x256xf32>,
      %c0_i32_13 = arith.constant 0 : i32
      %17 = tpu.memref_slice %arg19[%c0_i32_13] : memref<3x!tpu.dma_semaphore, #tpu.memory_space<semaphore_mem>> -> memref<1x!tpu.dma_semaphore, #tpu.memory_space<semaphore_mem>>
      %18 = tpu.memref_squeeze %17 : memref<1x!tpu.dma_semaphore, #tpu.memory_space<semaphore_mem>> -> memref<!tpu.dma_semaphore, #tpu.memory_space<semaphore_mem>>
      tpu.enqueue_dma source(%arg5 : memref<256x256xbf16, #tpu.memory_space<any>>) target(%arg16 : memref<256x256xbf16, #tpu.memory_space<vmem>>) target_semaphore(%18 : memref<!tpu.dma_semaphore, #tpu.memory_space<semaphore_mem>>)
      %c1_i32_14 = arith.constant 1 : i32
      %19 = tpu.memref_slice %arg19[%c1_i32_14] : memref<3x!tpu.dma_semaphore, #tpu.memory_space<semaphore_mem>> -> memref<1x!tpu.dma_semaphore, #tpu.memory_space<semaphore_mem>>
      %20 = tpu.memref_squeeze %19 : memref<1x!tpu.dma_semaphore, #tpu.memory_space<semaphore_mem>> -> memref<!tpu.dma_semaphore, #tpu.memory_space<semaphore_mem>>
      tpu.enqueue_dma source(%arg7 : memref<8x8x128xbf16, #tpu.memory_space<any>>) target(%arg17 : memref<8x8x128xbf16, #tpu.memory_space<vmem>>) target_semaphore(%20 : memref<!tpu.dma_semaphore, #tpu.memory_space<semaphore_mem>>)
      %c2_i32 = arith.constant 2 : i32
      %21 = tpu.memref_slice %arg19[%c2_i32] : memref<3x!tpu.dma_semaphore, #tpu.memory_space<semaphore_mem>> -> memref<1x!tpu.dma_semaphore, #tpu.memory_space<semaphore_mem>>
      %22 = tpu.memref_squeeze %21 : memref<1x!tpu.dma_semaphore, #tpu.memory_space<semaphore_mem>> -> memref<!tpu.dma_semaphore, #tpu.memory_space<semaphore_mem>>
      tpu.enqueue_dma source(%arg9 : memref<384x384xbf16, #tpu.memory_space<any>>) target(%arg18 : memref<384x384xbf16, #tpu.memory_space<vmem>>) target_semaphore(%22 : memref<!tpu.dma_semaphore, #tpu.memory_space<semaphore_mem>>)
    } else {
    }
    %c0 = arith.constant 0 : index
    %c0_1 = arith.constant 0 : index
    %3 = vector.load %arg14[%c0, %c0_1] : memref<8x256xf32, #tpu.memory_space<vmem>>, vector<8x256xf32>
    %c0_2 = arith.constant 0 : index
    %c0_3 = arith.constant 0 : index
    %4 = vector.load %arg1[%c0_2, %c0_3] : memref<8x512xbf16, #tpu.memory_space<vmem>>, vector<8x512xbf16>
    %c0_4 = arith.constant 0 : index
    %c0_5 = arith.constant 0 : index
    %5 = vector.load %arg2[%c0_4, %c0_5] : memref<512x256xi8, #tpu.memory_space<vmem>>, vector<512x256xi8>
    %6 = arith.sitofp %5 : vector<512x256xi8> to vector<512x256xbf16>
    %cst = arith.constant dense<0.000000e+00> : vector<8x256xf32>
    %7 = tpu.matmul %4, %6, %cst {dimension_numbers = #tpu.dot_dimension_numbers<[1], [0], [0], [1], [0, 0, 1, 1], [], []>} : vector<8x512xbf16>, vector<512x256xbf16>, vector<8x256xf32> -> vector<8x256xf32>
    %8 = arith.addf %3, %7 : vector<8x256xf32>
    %c0_6 = arith.constant 0 : index
    %c0_7 = arith.constant 0 : index
    %9 = vector.load %arg14[%c0_6, %c0_7] : memref<8x256xf32, #tpu.memory_space<vmem>>, vector<8x256xf32>
    tpu.vector_store %arg14[%c0_6, %c0_7], %8 {strides = array<i32>} : memref<8x256xf32, #tpu.memory_space<vmem>>, vector<8x256xf32>,
    %c1_i32 = arith.constant 1 : i32
    %10 = arith.cmpi eq, %arg0, %c1_i32 : i32
    %11 = arith.extui %10 : i1 to i32
    %c0_i32_8 = arith.constant 0 : i32
    %12 = arith.cmpi ne, %11, %c0_i32_8 : i32
    scf.if %12 {
      %c0_i32_9 = arith.constant 0 : i32
      %13 = tpu.memref_slice %arg19[%c0_i32_9] : memref<3x!tpu.dma_semaphore, #tpu.memory_space<semaphore_mem>> -> memref<1x!tpu.dma_semaphore, #tpu.memory_space<semaphore_mem>>
      %14 = tpu.memref_squeeze %13 : memref<1x!tpu.dma_semaphore, #tpu.memory_space<semaphore_mem>> -> memref<!tpu.dma_semaphore, #tpu.memory_space<semaphore_mem>>
      tpu.wait_dma2 semaphore(%14 : memref<!tpu.dma_semaphore, #tpu.memory_space<semaphore_mem>>) src(%arg5 : memref<256x256xbf16, #tpu.memory_space<any>>) dst(%arg16 : memref<256x256xbf16, #tpu.memory_space<vmem>>)
      %c1_i32_10 = arith.constant 1 : i32
      %15 = tpu.memref_slice %arg19[%c1_i32_10] : memref<3x!tpu.dma_semaphore, #tpu.memory_space<semaphore_mem>> -> memref<1x!tpu.dma_semaphore, #tpu.memory_space<semaphore_mem>>
      %16 = tpu.memref_squeeze %15 : memref<1x!tpu.dma_semaphore, #tpu.memory_space<semaphore_mem>> -> memref<!tpu.dma_semaphore, #tpu.memory_space<semaphore_mem>>
      tpu.wait_dma2 semaphore(%16 : memref<!tpu.dma_semaphore, #tpu.memory_space<semaphore_mem>>) src(%arg7 : memref<8x8x128xbf16, #tpu.memory_space<any>>) dst(%arg17 : memref<8x8x128xbf16, #tpu.memory_space<vmem>>)
      %c2_i32 = arith.constant 2 : i32
      %17 = tpu.memref_slice %arg19[%c2_i32] : memref<3x!tpu.dma_semaphore, #tpu.memory_space<semaphore_mem>> -> memref<1x!tpu.dma_semaphore, #tpu.memory_space<semaphore_mem>>
      %18 = tpu.memref_squeeze %17 : memref<1x!tpu.dma_semaphore, #tpu.memory_space<semaphore_mem>> -> memref<!tpu.dma_semaphore, #tpu.memory_space<semaphore_mem>>
      tpu.wait_dma2 semaphore(%18 : memref<!tpu.dma_semaphore, #tpu.memory_space<semaphore_mem>>) src(%arg9 : memref<384x384xbf16, #tpu.memory_space<any>>) dst(%arg18 : memref<384x384xbf16, #tpu.memory_space<vmem>>)
      %c0_11 = arith.constant 0 : index
      %c0_12 = arith.constant 0 : index
      %19 = vector.load %arg14[%c0_11, %c0_12] : memref<8x256xf32, #tpu.memory_space<vmem>>, vector<8x256xf32>
      %c0_13 = arith.constant 0 : index
      %c0_14 = arith.constant 0 : index
      %20 = vector.load %arg4[%c0_13, %c0_14] : memref<1x256xf32, #tpu.memory_space<vmem>>, vector<1x256xf32>
      %21 = vector.broadcast %20 : vector<1x256xf32> to vector<8x256xf32>
      %22 = arith.mulf %19, %21 : vector<8x256xf32>
      %cst_15 = arith.constant 0.000000e+00 : f32
      %23 = vector.broadcast %cst_15 : f32 to vector<8x256xf32>
      %24 = arith.maximumf %22, %23 : vector<8x256xf32>
      %25 = arith.truncf %24 : vector<8x256xf32> to vector<8x256xbf16>
      %c0_16 = arith.constant 0 : index
      %c0_17 = arith.constant 0 : index
      %26 = vector.load %arg16[%c0_16, %c0_17] : memref<256x256xbf16, #tpu.memory_space<vmem>>, vector<256x256xbf16>
      %cst_18 = arith.constant dense<0.000000e+00> : vector<8x256xf32>
      %27 = tpu.matmul %25, %26, %cst_18 {dimension_numbers = #tpu.dot_dimension_numbers<[1], [0], [0], [1], [0, 0, 1, 1], [], []>} : vector<8x256xbf16>, vector<256x256xbf16>, vector<8x256xf32> -> vector<8x256xf32>
      %c0_19 = arith.constant 0 : index
      %c0_20 = arith.constant 0 : index
      %28 = vector.load %arg6[%c0_19, %c0_20] : memref<1x256xf32, #tpu.memory_space<vmem>>, vector<1x256xf32>
      %29 = vector.broadcast %28 : vector<1x256xf32> to vector<8x256xf32>
      %30 = arith.addf %27, %29 : vector<8x256xf32>
      %c0_21 = arith.constant 0 : index
      %c0_22 = arith.constant 0 : index
      %c0_23 = arith.constant 0 : index
      %31 = vector.load %arg17[%c0_21, %c0_22, %c0_23] : memref<8x8x128xbf16, #tpu.memory_space<vmem>>, vector<8x8x128xbf16>
      %32 = arith.extf %31 : vector<8x8x128xbf16> to vector<8x8x128xf32>
      %c0_24 = arith.constant 0 : index
      %c0_25 = arith.constant 0 : index
      %33 = vector.load %arg8[%c0_24, %c0_25] : memref<8x8xf32, #tpu.memory_space<vmem>>, vector<8x8xf32>
      %34 = vector.shape_cast %33 : vector<8x8xf32> to vector<8x8x1xf32>
      %35 = vector.broadcast %34 : vector<8x8x1xf32> to vector<8x8x128xf32>
      %36 = arith.mulf %32, %35 : vector<8x8x128xf32>
      %cst_26 = arith.constant dense<0.000000e+00> : vector<8x128xf32>
      %37 = vector.multi_reduction <add>, %36, %cst_26 [1] : vector<8x8x128xf32> to vector<8x128xf32>
      %cst_27 = arith.constant dense<0.000000e+00> : vector<8x1xf32>
      %38 = vector.multi_reduction <add>, %34, %cst_27 [1] : vector<8x8x1xf32> to vector<8x1xf32>
      %cst_28 = arith.constant 9.99999971E-10 : f32
      %39 = vector.broadcast %cst_28 : f32 to vector<8x1xf32>
      %40 = arith.maximumf %38, %39 : vector<8x1xf32>
      %41 = vector.broadcast %40 : vector<8x1xf32> to vector<8x128xf32>
      %42 = arith.divf %37, %41 : vector<8x128xf32>
      %43 = arith.mulf %42, %42 : vector<8x128xf32>
      %cst_29 = arith.constant dense<0.000000e+00> : vector<8xf32>
      %44 = vector.multi_reduction <add>, %43, %cst_29 [1] : vector<8x128xf32> to vector<8xf32>
      %45 = vector.shape_cast %44 : vector<8xf32> to vector<8x1xf32>
      %cst_30 = arith.constant 1.000000e-24 : f32
      %46 = vector.broadcast %cst_30 : f32 to vector<8x1xf32>
      %47 = arith.maximumf %45, %46 : vector<8x1xf32>
      %48 = math.rsqrt %47 : vector<8x1xf32>
      %49 = vector.broadcast %48 : vector<8x1xf32> to vector<8x128xf32>
      %50 = arith.mulf %42, %49 : vector<8x128xf32>
      %c0_31 = arith.constant 0 : index
      %c0_32 = arith.constant 0 : index
      %51 = vector.load %arg15[%c0_31, %c0_32] : memref<8x384xf32, #tpu.memory_space<vmem>>, vector<8x256xf32>
      tpu.vector_store %arg15[%c0_31, %c0_32], %30 {strides = array<i32>} : memref<8x384xf32, #tpu.memory_space<vmem>>, vector<8x256xf32>,
      %c0_33 = arith.constant 0 : index
      %c256 = arith.constant 256 : index
      %52 = vector.load %arg15[%c0_33, %c256] : memref<8x384xf32, #tpu.memory_space<vmem>>, vector<8x128xf32>
      tpu.vector_store %arg15[%c0_33, %c256], %50 {strides = array<i32>} : memref<8x384xf32, #tpu.memory_space<vmem>>, vector<8x128xf32>,
      %c0_34 = arith.constant 0 : index
      %c0_35 = arith.constant 0 : index
      %53 = vector.load %arg15[%c0_34, %c0_35] : memref<8x384xf32, #tpu.memory_space<vmem>>, vector<8x384xf32>
      %54 = arith.truncf %53 : vector<8x384xf32> to vector<8x384xbf16>
      %c0_36 = arith.constant 0 : index
      %c0_37 = arith.constant 0 : index
      %55 = vector.load %arg18[%c0_36, %c0_37] : memref<384x384xbf16, #tpu.memory_space<vmem>>, vector<384x384xbf16>
      %cst_38 = arith.constant dense<0.000000e+00> : vector<8x384xf32>
      %56 = tpu.matmul %54, %55, %cst_38 {dimension_numbers = #tpu.dot_dimension_numbers<[1], [0], [0], [1], [0, 0, 1, 1], [], []>} : vector<8x384xbf16>, vector<384x384xbf16>, vector<8x384xf32> -> vector<8x384xf32>
      %c0_39 = arith.constant 0 : index
      %c0_40 = arith.constant 0 : index
      %57 = vector.load %arg10[%c0_39, %c0_40] : memref<1x384xf32, #tpu.memory_space<vmem>>, vector<1x384xf32>
      %58 = vector.broadcast %57 : vector<1x384xf32> to vector<8x384xf32>
      %59 = arith.addf %56, %58 : vector<8x384xf32>
      %cst_41 = arith.constant 0.000000e+00 : f32
      %60 = vector.broadcast %cst_41 : f32 to vector<8x384xf32>
      %61 = arith.maximumf %59, %60 : vector<8x384xf32>
      %62 = arith.truncf %61 : vector<8x384xf32> to vector<8x384xbf16>
      %c0_42 = arith.constant 0 : index
      %c0_43 = arith.constant 0 : index
      %63 = vector.load %arg11[%c0_42, %c0_43] : memref<384x128xbf16, #tpu.memory_space<vmem>>, vector<384x128xbf16>
      %cst_44 = arith.constant dense<0.000000e+00> : vector<8x128xf32>
      %64 = tpu.matmul %62, %63, %cst_44 {dimension_numbers = #tpu.dot_dimension_numbers<[1], [0], [0], [1], [0, 0, 1, 1], [], []>} : vector<8x384xbf16>, vector<384x128xbf16>, vector<8x128xf32> -> vector<8x128xf32>
      %c0_45 = arith.constant 0 : index
      %c0_46 = arith.constant 0 : index
      %65 = vector.load %arg12[%c0_45, %c0_46] : memref<1x128xf32, #tpu.memory_space<vmem>>, vector<1x128xf32>
      %66 = vector.broadcast %65 : vector<1x128xf32> to vector<8x128xf32>
      %67 = arith.addf %64, %66 : vector<8x128xf32>
      %c0_47 = arith.constant 0 : index
      %c0_48 = arith.constant 0 : index
      %68 = vector.load %arg13[%c0_47, %c0_48] : memref<8x128xf32, #tpu.memory_space<vmem>>, vector<8x128xf32>
      tpu.vector_store %arg13[%c0_47, %c0_48], %67 {strides = array<i32>} : memref<8x128xf32, #tpu.memory_space<vmem>>, vector<8x128xf32>,
    } else {
    }
    return
  }
  func.func @transform_0(%arg0: i32) -> (i32, i32) {
    %c0_i32 = arith.constant 0 : i32
    %c0_i32_0 = arith.constant 0 : i32
    return %c0_i32, %arg0 : i32, i32
  }
  func.func @transform_1(%arg0: i32) -> (i32, i32) {
    %c0_i32 = arith.constant 0 : i32
    %c0_i32_0 = arith.constant 0 : i32
    return %arg0, %c0_i32 : i32, i32
  }
  func.func @transform_2(%arg0: i32) -> (i32, i32) {
    %c0_i32 = arith.constant 0 : i32
    %c0_i32_0 = arith.constant 0 : i32
    %c0_i32_1 = arith.constant 0 : i32
    return %c0_i32, %c0_i32_0 : i32, i32
  }
  func.func @transform_3(%arg0: i32) -> (i32, i32) {
    %c0_i32 = arith.constant 0 : i32
    %c0_i32_0 = arith.constant 0 : i32
    %c0_i32_1 = arith.constant 0 : i32
    return %c0_i32, %c0_i32_0 : i32, i32
  }
  func.func @transform_5(%arg0: i32) -> (i32, i32) {
    %c0_i32 = arith.constant 0 : i32
    %c0_i32_0 = arith.constant 0 : i32
    %c0_i32_1 = arith.constant 0 : i32
    return %c0_i32, %c0_i32_0 : i32, i32
  }
  func.func @transform_7(%arg0: i32) -> (i32, i32) {
    %c0_i32 = arith.constant 0 : i32
    %c0_i32_0 = arith.constant 0 : i32
    %c0_i32_1 = arith.constant 0 : i32
    return %c0_i32, %c0_i32_0 : i32, i32
  }
  func.func @transform_9(%arg0: i32) -> (i32, i32) {
    %c0_i32 = arith.constant 0 : i32
    %c0_i32_0 = arith.constant 0 : i32
    %c0_i32_1 = arith.constant 0 : i32
    return %c0_i32, %c0_i32_0 : i32, i32
  }
  func.func @transform_10(%arg0: i32) -> (i32, i32) {
    %c0_i32 = arith.constant 0 : i32
    %c0_i32_0 = arith.constant 0 : i32
    %c0_i32_1 = arith.constant 0 : i32
    return %c0_i32, %c0_i32_0 : i32, i32
  }
  func.func @transform_11(%arg0: i32) -> (i32, i32) {
    %c0_i32 = arith.constant 0 : i32
    %c0_i32_0 = arith.constant 0 : i32
    %c0_i32_1 = arith.constant 0 : i32
    return %c0_i32, %c0_i32_0 : i32, i32
  }
  func.func @transform_12(%arg0: i32) -> (i32, i32) {
    %c0_i32 = arith.constant 0 : i32
    %c0_i32_0 = arith.constant 0 : i32
    %c0_i32_1 = arith.constant 0 : i32
    return %c0_i32, %c0_i32_0 : i32, i32
  }
}

</mosaic_0001>

<llo_original>
// kernel: baseline_model_forward.1
$region0: #{baseline_model_forward.1}
  #allocation0 [shape = 'u32[]', space=smem, size = 0x4, offset = 0x4, fixed_abs, tag = 'smem constant byte address 0x4 - core index']
  #allocation1 [shape = 'u32[144,128]{1,0:T(1,128)}', space=vmem, size = 0x12000, scoped, tag = 'internal scratch']
  #allocation2 [shape = 'f32[8,256]{1,0:T(8,128)}', space=vmem, size = 0x2000, scoped, tag = 'scratch operand']
  #allocation3 [shape = 'f32[8,384]{1,0:T(8,128)}', space=vmem, size = 0x3000, scoped, tag = 'scratch operand']
  #allocation4 [shape = 'bf16[256,256]{1,0:T(16,128)(2,1)}', space=vmem, size = 0x20000, scoped, tag = 'scratch operand']
  #allocation5 [shape = 'bf16[8,8,128]{2,1,0:T(8,128)(2,1)}', space=vmem, size = 0x4000, scoped, tag = 'scratch operand']
  #allocation6 [shape = 'bf16[384,384]{1,0:T(16,128)(2,1)}', space=vmem, size = 0x48000, scoped, tag = 'scratch operand']
  #allocation7 [shape = 's32[3]{0}', space=sflag, size = 0xc, scoped, tag = 'scratch operand']
  #allocation12 [shape = 's32[]', space=sflag, size = 0x4, offset = 0, fixed_abs, tag = 'sflag constant byte address 0x0 - dummy sync flag']
  #allocation14 [shape = 's32[]', space=sflag, size = 0x4, offset = 0, fixed_abs, tag = 'sflag constant byte address 0x0 - dummy sync flag']
  #allocation15 [shape = 's32[]', space=sflag, size = 0x4, offset = 0, fixed_abs, tag = 'sflag constant byte address 0x0 - dummy sync flag']
  %s0 = inlined_call_operand.vmem [shape: bf16[8,1024], index: 0, kind: input, shape index: {}]
  %s1 = inlined_call_operand.hbm [shape: s8[1024,256], index: 1, kind: input, shape index: {}]
  %s2 = inlined_call_operand.vmem [shape: f32[1,256], index: 2, kind: input, shape index: {}]
  %s3 = inlined_call_operand.vmem [shape: f32[1,256], index: 3, kind: input, shape index: {}]
  %s4 = inlined_call_operand.hbm [shape: bf16[256,256], index: 4, kind: input, shape index: {}]
  %s5 = inlined_call_operand.vmem [shape: f32[1,256], index: 5, kind: input, shape index: {}]
  %s6 = inlined_call_operand.vmem [shape: bf16[8,8,128], index: 6, kind: input, shape index: {}]
  %s7 = inlined_call_operand.vmem [shape: f32[8,8], index: 7, kind: input, shape index: {}]
  %s8 = inlined_call_operand.hbm [shape: bf16[384,384], index: 8, kind: input, shape index: {}]
  %s9 = inlined_call_operand.vmem [shape: f32[1,384], index: 9, kind: input, shape index: {}]
  %s10 = inlined_call_operand.hbm [shape: bf16[384,128], index: 10, kind: input, shape index: {}]
  %s11 = inlined_call_operand.vmem [shape: f32[1,128], index: 11, kind: input, shape index: {}]
  %s12 = inlined_call_operand.vmem [shape: f32[8,128], index: 12, kind: output, shape index: {}]
  %s13 = sld [smem:[#allocation0]]
  $region119: #{baseline_model_forward.1} parent=0
    _
  %s15 = ssub.s32 1, %s13
  %s16 = scalar_select 0, %s15, %s13
  $region1: #{baseline_model_forward.1} parent=0
    #allocation8 [shape = 'u8[262144]{0}', space=vmem, size = 0x40000, scoped, tag = 'input window, operand 1']
    #allocation9 [shape = 's32[2]{0}', space=sflag, size = 0x8, scoped, tag = 'scoped memory for baseline_model_forward.1']
    #allocation10 [shape = 'u8[98304]{0}', space=vmem, size = 0x18000, scoped, tag = 'input window, operand 10, single buffered']
    #allocation11 [shape = 's32[1]{0}', space=sflag, size = 0x4, scoped, tag = 'scoped memory for baseline_model_forward.1']
    %17 = vsyncpa [#allocation9], 0
    %s18 = scalar_lea.sflag [#allocation9], 1
    %19 = vsyncpa %s18, 0
    %20 = vsyncpa [#allocation11], 0
    loop: start=0, step=1, limit=4
    $region2: #{baseline_model_forward.1} parent=1 // loop_pre_header
      _
    $region3: #{baseline_model_forward.1} parent=1 // loop_header
      %s22 = sphi 0, %s26
      %p23 = scmp.ge.s32.totalorder %s22, 4
      %s32 = sphi 0, %s34
      %s35 = sphi 0, %s32
      %s36 = sphi 0, %s35
      %s52 = sphi 0, %s36
      %s58 = sphi 0, %s60
      %s61 = sphi 0, %s58
      %s62 = sphi 0, %s61
      %s78 = sphi 0, %s62
      %s82 = sphi 0, %s82
      %s84 = sphi 0, %s82
      %s85 = sphi 0, %s84
      %s99 = sphi 0, %s85
      %s103 = sphi 0, %s103
      %s105 = sphi 0, %s103
      %s106 = sphi 0, %s105
      %s120 = sphi 0, %s106
      %s124 = sphi 0, %s124
      %s126 = sphi 0, %s124
      %s127 = sphi 0, %s126
      %s141 = sphi 0, %s127
      %s145 = sphi 0, %s145
      %s147 = sphi 0, %s145
      %s148 = sphi 0, %s147
      %s162 = sphi 0, %s148
      %s166 = sphi 0, %s166
      %s168 = sphi 0, %s166
      %s169 = sphi 0, %s168
      %s183 = sphi 0, %s169
      %s187 = sphi 0, %s187
      %s189 = sphi 0, %s187
      %s190 = sphi 0, %s189
      %s204 = sphi 0, %s190
      %s208 = sphi 0, %s208
      %s210 = sphi 0, %s208
      %s211 = sphi 0, %s210
      %s225 = sphi 0, %s211
      %s229 = sphi 0, %s229
      %s231 = sphi 0, %s229
      %s232 = sphi 0, %s231
      %s246 = sphi 0, %s232
    $region4: #{baseline_model_forward.1} parent=1 // loop_header_branch
      %25 = sbr.rel (%p23) target = $region8
    $region5: #{baseline_model_forward.1} parent=1 // loop_body
      %s27 = ssub.s32 %s22, 1
      %s28 = ssub.s32 %s22, 2
      %s29 = sadd.s32 %s22, 1
      %s30 = ssub.s32 %s22, %s29
      %p31 = scmp.eq.s32.totalorder %s30, 0
      %s33 = sadd.s32 %s32, 1
      %s34 = scalar_select %p31, %s32, %s33
      %p37 = pneg %p31
      %p38 = scmp.eq.s32.totalorder %s22, 1
      %p39 = por %p37, %p38
      %p40 = scmp.ne.s32.totalorder %s32, %s35
      %p41 = scmp.eq.s32.totalorder %s22, 0
      %p42 = por %p40, %p41
      %p43 = scmp.ne.s32.totalorder %s32, %s35
      %p44 = scmp.eq.s32.totalorder %s27, 1
      %p45 = por %p43, %p44
      %p46 = scmp.ne.s32.totalorder %s35, %s36
      %p47 = scmp.eq.s32.totalorder %s27, 0
      %p48 = por %p46, %p47
      %p49 = scmp.ne.s32.totalorder %s35, %s36
      %p50 = scmp.eq.s32.totalorder %s28, 1
      %p51 = por %p49, %p50
      %p53 = scmp.ne.s32.totalorder %s36, %s52
      %p54 = scmp.eq.s32.totalorder %s28, 0
      %p55 = por %p53, %p54
      %s56 = ssub.s32 %s22, %s29
      %p57 = scmp.eq.s32.totalorder %s56, 0
      %s59 = sadd.s32 %s58, 1
      %s60 = scalar_select %p57, %s58, %s59
      %p63 = pneg %p57
      %p64 = scmp.eq.s32.totalorder %s22, 1
      %p65 = por %p63, %p64
      %p66 = scmp.ne.s32.totalorder %s58, %s61
      %p67 = scmp.eq.s32.totalorder %s22, 0
      %p68 = por %p66, %p67
      %p69 = scmp.ne.s32.totalorder %s58, %s61
      %p70 = scmp.eq.s32.totalorder %s27, 1
      %p71 = por %p69, %p70
      %p72 = scmp.ne.s32.totalorder %s61, %s62
      %p73 = scmp.eq.s32.totalorder %s27, 0
      %p74 = por %p72, %p73
      %p75 = scmp.ne.s32.totalorder %s61, %s62
      %p76 = scmp.eq.s32.totalorder %s28, 1
      %p77 = por %p75, %p76
      %p79 = scmp.ne.s32.totalorder %s62, %s78
      %p80 = scmp.eq.s32.totalorder %s28, 0
      %p81 = por %p79, %p80
      %s83 = sadd.s32 %s82, 1
      %p86 = scmp.eq.s32.totalorder %s22, 1
      %p87 = scmp.ne.s32.totalorder %s82, %s84
      %p88 = scmp.eq.s32.totalorder %s22, 0
      %p89 = por %p87, %p88
      %p90 = scmp.ne.s32.totalorder %s82, %s84
      %p91 = scmp.eq.s32.totalorder %s27, 1
      %p92 = por %p90, %p91
      %p93 = scmp.ne.s32.totalorder %s84, %s85
      %p94 = scmp.eq.s32.totalorder %s27, 0
      %p95 = por %p93, %p94
      %p96 = scmp.ne.s32.totalorder %s84, %s85
      %p97 = scmp.eq.s32.totalorder %s28, 1
      %p98 = por %p96, %p97
      %p100 = scmp.ne.s32.totalorder %s85, %s99
      %p101 = scmp.eq.s32.totalorder %s28, 0
      %p102 = por %p100, %p101
      %s104 = sadd.s32 %s103, 1
      %p107 = scmp.eq.s32.totalorder %s22, 1
      %p108 = scmp.ne.s32.totalorder %s103, %s105
      %p109 = scmp.eq.s32.totalorder %s22, 0
      %p110 = por %p108, %p109
      %p111 = scmp.ne.s32.totalorder %s103, %s105
      %p112 = scmp.eq.s32.totalorder %s27, 1
      %p113 = por %p111, %p112
      %p114 = scmp.ne.s32.totalorder %s105, %s106
      %p115 = scmp.eq.s32.totalorder %s27, 0
      %p116 = por %p114, %p115
      %p117 = scmp.ne.s32.totalorder %s105, %s106
      %p118 = scmp.eq.s32.totalorder %s28, 1
      %p119 = por %p117, %p118
      %p121 = scmp.ne.s32.totalorder %s106, %s120
      %p122 = scmp.eq.s32.totalorder %s28, 0
      %p123 = por %p121, %p122
      %s125 = sadd.s32 %s124, 1
      %p128 = scmp.eq.s32.totalorder %s22, 1
      %p129 = scmp.ne.s32.totalorder %s124, %s126
      %p130 = scmp.eq.s32.totalorder %s22, 0
      %p131 = por %p129, %p130
      %p132 = scmp.ne.s32.totalorder %s124, %s126
      %p133 = scmp.eq.s32.totalorder %s27, 1
      %p134 = por %p132, %p133
      %p135 = scmp.ne.s32.totalorder %s126, %s127
      %p136 = scmp.eq.s32.totalorder %s27, 0
      %p137 = por %p135, %p136
      %p138 = scmp.ne.s32.totalorder %s126, %s127
      %p139 = scmp.eq.s32.totalorder %s28, 1
      %p140 = por %p138, %p139
      %p142 = scmp.ne.s32.totalorder %s127, %s141
      %p143 = scmp.eq.s32.totalorder %s28, 0
      %p144 = por %p142, %p143
      %s146 = sadd.s32 %s145, 1
      %p149 = scmp.eq.s32.totalorder %s22, 1
      %p150 = scmp.ne.s32.totalorder %s145, %s147
      %p151 = scmp.eq.s32.totalorder %s22, 0
      %p152 = por %p150, %p151
      %p153 = scmp.ne.s32.totalorder %s145, %s147
      %p154 = scmp.eq.s32.totalorder %s27, 1
      %p155 = por %p153, %p154
      %p156 = scmp.ne.s32.totalorder %s147, %s148
      %p157 = scmp.eq.s32.totalorder %s27, 0
      %p158 = por %p156, %p157
      %p159 = scmp.ne.s32.totalorder %s147, %s148
      %p160 = scmp.eq.s32.totalorder %s28, 1
      %p161 = por %p159, %p160
      %p163 = scmp.ne.s32.totalorder %s148, %s162
      %p164 = scmp.eq.s32.totalorder %s28, 0
      %p165 = por %p163, %p164
      %s167 = sadd.s32 %s166, 1
      %p170 = scmp.eq.s32.totalorder %s22, 1
      %p171 = scmp.ne.s32.totalorder %s166, %s168
      %p172 = scmp.eq.s32.totalorder %s22, 0
      %p173 = por %p171, %p172
      %p174 = scmp.ne.s32.totalorder %s166, %s168
      %p175 = scmp.eq.s32.totalorder %s27, 1
      %p176 = por %p174, %p175
      %p177 = scmp.ne.s32.totalorder %s168, %s169
      %p178 = scmp.eq.s32.totalorder %s27, 0
      %p179 = por %p177, %p178
      %p180 = scmp.ne.s32.totalorder %s168, %s169
      %p181 = scmp.eq.s32.totalorder %s28, 1
      %p182 = por %p180, %p181
      %p184 = scmp.ne.s32.totalorder %s169, %s183
      %p185 = scmp.eq.s32.totalorder %s28, 0
      %p186 = por %p184, %p185
      %s188 = sadd.s32 %s187, 1
      %p191 = scmp.eq.s32.totalorder %s22, 1
      %p192 = scmp.ne.s32.totalorder %s187, %s189
      %p193 = scmp.eq.s32.totalorder %s22, 0
      %p194 = por %p192, %p193
      %p195 = scmp.ne.s32.totalorder %s187, %s189
      %p196 = scmp.eq.s32.totalorder %s27, 1
      %p197 = por %p195, %p196
      %p198 = scmp.ne.s32.totalorder %s189, %s190
      %p199 = scmp.eq.s32.totalorder %s27, 0
      %p200 = por %p198, %p199
      %p201 = scmp.ne.s32.totalorder %s189, %s190
      %p202 = scmp.eq.s32.totalorder %s28, 1
      %p203 = por %p201, %p202
      %p205 = scmp.ne.s32.totalorder %s190, %s204
      %p206 = scmp.eq.s32.totalorder %s28, 0
      %p207 = por %p205, %p206
      %s209 = sadd.s32 %s208, 1
      %p212 = scmp.eq.s32.totalorder %s22, 1
      %p213 = scmp.ne.s32.totalorder %s208, %s210
      %p214 = scmp.eq.s32.totalorder %s22, 0
      %p215 = por %p213, %p214
      %p216 = scmp.ne.s32.totalorder %s208, %s210
      %p217 = scmp.eq.s32.totalorder %s27, 1
      %p218 = por %p216, %p217
      %p219 = scmp.ne.s32.totalorder %s210, %s211
      %p220 = scmp.eq.s32.totalorder %s27, 0
      %p221 = por %p219, %p220
      %p222 = scmp.ne.s32.totalorder %s210, %s211
      %p223 = scmp.eq.s32.totalorder %s28, 1
      %p224 = por %p222, %p223
      %p226 = scmp.ne.s32.totalorder %s211, %s225
      %p227 = scmp.eq.s32.totalorder %s28, 0
      %p228 = por %p226, %p227
      %s230 = sadd.s32 %s229, 1
      %p233 = scmp.eq.s32.totalorder %s22, 1
      %p234 = scmp.ne.s32.totalorder %s229, %s231
      %p235 = scmp.eq.s32.totalorder %s22, 0
      %p236 = por %p234, %p235
      %p237 = scmp.ne.s32.totalorder %s229, %s231
      %p238 = scmp.eq.s32.totalorder %s27, 1
      %p239 = por %p237, %p238
      %p240 = scmp.ne.s32.totalorder %s231, %s232
      %p241 = scmp.eq.s32.totalorder %s27, 0
      %p242 = por %p240, %p241
      %p243 = scmp.ne.s32.totalorder %s231, %s232
      %p244 = scmp.eq.s32.totalorder %s28, 1
      %p245 = por %p243, %p244
      %p247 = scmp.ne.s32.totalorder %s232, %s246
      %p248 = scmp.eq.s32.totalorder %s28, 0
      %p249 = por %p247, %p248
      %p250 = scmp.le.s32.totalorder 1, %s22
      %p251 = scmp.lt.s32.totalorder %s22, 3
      %p252 = pnand %p250, %p251
      %p253 = pneg %p252
      // Predicated region
      $region9: #{baseline_model_forward.1} parent=5 // pred_check
        _
      $region10: #{baseline_model_forward.1} parent=5 // pred_check_branch
        %255 = sbr.rel (%p252) target = $region12
      $region11: #{baseline_model_forward.1} parent=5 // pred_region
        %s256 = ssub.s32 %s22, 1
        // Predicated region
        $region13: #{baseline_model_forward.1} parent=11 // pred_check
          %p257 = pneg %p95
        $region14: #{baseline_model_forward.1} parent=11 // pred_check_branch
          %259 = sbr.rel (%p257) target = $region16
        $region15: #{baseline_model_forward.1} parent=11 // pred_region
          _
        $region16: #{baseline_model_forward.1} parent=11 // pred_fallthru
          _
        // Predicated region
        $region17: #{baseline_model_forward.1} parent=11 // pred_check
          %p260 = pneg %p116
        $region18: #{baseline_model_forward.1} parent=11 // pred_check_branch
          %262 = sbr.rel (%p260) target = $region20
        $region19: #{baseline_model_forward.1} parent=11 // pred_region
          _
        $region20: #{baseline_model_forward.1} parent=11 // pred_fallthru
          _
        // Predicated region
        $region21: #{baseline_model_forward.1} parent=11 // pred_check
          %p263 = pneg %p137
        $region22: #{baseline_model_forward.1} parent=11 // pred_check_branch
          %265 = sbr.rel (%p263) target = $region24
        $region23: #{baseline_model_forward.1} parent=11 // pred_region
          _
        $region24: #{baseline_model_forward.1} parent=11 // pred_fallthru
          _
        // Predicated region
        $region25: #{baseline_model_forward.1} parent=11 // pred_check
          %p266 = pneg %p158
        $region26: #{baseline_model_forward.1} parent=11 // pred_check_branch
          %268 = sbr.rel (%p266) target = $region28
        $region27: #{baseline_model_forward.1} parent=11 // pred_region
          _
        $region28: #{baseline_model_forward.1} parent=11 // pred_fallthru
          _
        // Predicated region
        $region29: #{baseline_model_forward.1} parent=11 // pred_check
          %p269 = pneg %p179
        $region30: #{baseline_model_forward.1} parent=11 // pred_check_branch
          %271 = sbr.rel (%p269) target = $region32
        $region31: #{baseline_model_forward.1} parent=11 // pred_region
          _
        $region32: #{baseline_model_forward.1} parent=11 // pred_fallthru
          _
        // Predicated region
        $region33: #{baseline_model_forward.1} parent=11 // pred_check
          %p272 = pneg %p200
        $region34: #{baseline_model_forward.1} parent=11 // pred_check_branch
          %274 = sbr.rel (%p272) target = $region36
        $region35: #{baseline_model_forward.1} parent=11 // pred_region
          %s276 = ssub.s32 3072, 3072
          %277 = vsyncadd [#allocation11], %s276
          %s278 = sshll.u32 [#allocation10], 4
          %s279 = int_to_ptr.vmem [resolvable:$true] %s278
          %284 = dma.hbm_to_vmem [thread:$0]  %s10, 3072, %s279, [#allocation11], 64, 64, 4
        $region36: #{baseline_model_forward.1} parent=11 // pred_fallthru
          _
        // Predicated region
        $region37: #{baseline_model_forward.1} parent=11 // pred_check
          %p285 = pneg %p221
        $region38: #{baseline_model_forward.1} parent=11 // pred_check_branch
          %287 = sbr.rel (%p285) target = $region40
        $region39: #{baseline_model_forward.1} parent=11 // pred_region
          _
        $region40: #{baseline_model_forward.1} parent=11 // pred_fallthru
          _
      $region12: #{baseline_model_forward.1} parent=5 // pred_fallthru
        _
      %p288 = scmp.lt.s32.totalorder %s22, 2
      // Predicated region
      $region41: #{baseline_model_forward.1} parent=5 // pred_check
        %p289 = pneg %p288
      $region42: #{baseline_model_forward.1} parent=5 // pred_check_branch
        %291 = sbr.rel (%p289) target = $region44
      $region43: #{baseline_model_forward.1} parent=5 // pred_region
        // Predicated region
        $region45: #{baseline_model_forward.1} parent=43 // pred_check
          %p292 = pneg %p42
        $region46: #{baseline_model_forward.1} parent=43 // pred_check_branch
          %294 = sbr.rel (%p292) target = $region48
        $region47: #{baseline_model_forward.1} parent=43 // pred_region
          %s295 = smul.u32 4, %s22
          %p296 = scmp.lt.s32.totalorder %s295, 7
          %s297 = scalar_select %p296, %s295, 7
          %s298 = smul.addr %s297, 4
          %s299 = scalar_lea.vmem %s0, %s298
          %s300 = smul.u32 4, %s22
        $region48: #{baseline_model_forward.1} parent=43 // pred_fallthru
          _
        // Predicated region
        $region49: #{baseline_model_forward.1} parent=43 // pred_check
          %p301 = pneg %p68
        $region50: #{baseline_model_forward.1} parent=43 // pred_check_branch
          %303 = sbr.rel (%p301) target = $region52
        $region51: #{baseline_model_forward.1} parent=43 // pred_region
          %s304 = sand.u32 %s58, 1
          %s305 = scalar_lea.sflag [#allocation9], %s304
          %s306 = sand.u32 %s58, 1
          %s307 = smul.addr %s306, 256
          %s308 = scalar_lea.vmem [#allocation8], %s307
          %s309 = smul.u32 16, %s22
          %s311 = ssub.s32 4096, 4096
          %312 = vsyncadd %s305, %s311
          %s313 = smul.addr %s309, 2
          %s314 = smul.addr %s313, 128
          %s315 = scalar_lea.hbm %s1, %s314
          %s316 = sshll.u32 %s308, 4
          %s317 = int_to_ptr.vmem [resolvable:$true] %s316
          %322 = dma.hbm_to_vmem [thread:$0]  %s315, 4096, %s317, %s305, 256, 256, 16
        $region52: #{baseline_model_forward.1} parent=43 // pred_fallthru
          _
      $region44: #{baseline_model_forward.1} parent=5 // pred_fallthru
        _
      %p323 = scmp.le.s32.totalorder 1, %s22
      %p324 = scmp.lt.s32.totalorder %s22, 3
      %p325 = pnand %p323, %p324
      %p326 = pneg %p325
      // Predicated region
      $region53: #{baseline_model_forward.1} parent=5 // pred_check
        _
      $region54: #{baseline_model_forward.1} parent=5 // pred_check_branch
        %328 = sbr.rel (%p325) target = $region56
      $region55: #{baseline_model_forward.1} parent=5 // pred_region
        %s329 = ssub.s32 %s22, 1
        %s330 = sand.u32 %s61, 1
        %s331 = scalar_lea.sflag [#allocation9], %s330
        %s332 = sand.u32 %s61, 1
        %s333 = smul.addr %s332, 256
        %s334 = scalar_lea.vmem [#allocation8], %s333
        // Predicated region
        $region57: #{baseline_model_forward.1} parent=55 // pred_check
          %p335 = pneg %p74
        $region58: #{baseline_model_forward.1} parent=55 // pred_check_branch
          %337 = sbr.rel (%p335) target = $region60
        $region59: #{baseline_model_forward.1} parent=55 // pred_region
          %338 = dma.done %s331, 4096
        $region60: #{baseline_model_forward.1} parent=55 // pred_fallthru
          _
        // Predicated region
        $region61: #{baseline_model_forward.1} parent=55 // pred_check
          %p339 = pneg %p200
        $region62: #{baseline_model_forward.1} parent=55 // pred_check_branch
          %341 = sbr.rel (%p339) target = $region64
        $region63: #{baseline_model_forward.1} parent=55 // pred_region
          %342 = dma.done [#allocation11], 3072
        $region64: #{baseline_model_forward.1} parent=55 // pred_fallthru
          _
        %s343 = smul.u32 4, %s27
        %p344 = scmp.lt.s32.totalorder %s343, 7
        %s345 = scalar_select %p344, %s343, 7
        %s346 = smul.addr %s345, 4
        %s347 = scalar_lea.vmem %s0, %s346
        %p348 = pneg %p48
        %p349 = pneg %p45
        %s350 = sand.u32 %s61, 1
        %s351 = scalar_lea.sflag [#allocation9], %s350
        %s352 = sand.u32 %s61, 1
        %s353 = smul.addr %s352, 256
        %s354 = scalar_lea.vmem [#allocation8], %s353
        %p355 = pneg %p74
        %p356 = pneg %p71
        %p357 = pneg %p95
        %p358 = pneg %p92
        %p359 = pneg %p116
        %p360 = pneg %p113
        %p361 = pneg %p137
        %p362 = pneg %p134
        %p363 = pneg %p158
        %p364 = pneg %p155
        %p365 = pneg %p179
        %p366 = pneg %p176
        %p367 = pneg %p200
        %p368 = pneg %p197
        %p369 = pneg %p221
        %p370 = pneg %p218
        %p371 = pneg %p242
        %p372 = pneg %p239
        %s373 = smul.u32 4, %s27
        %p374 = scmp.lt.s32.totalorder %s373, 7
        %s375 = scalar_select %p374, %s373, 7
        %s376 = smul.addr %s375, 4
        %s377 = scalar_lea.vmem %s0, %s376
        %s378 = smul.u32 4, %s27
        %s379 = smul.u32 16, %s27
        %p381 = scmp.eq.s32.totalorder %s27, 0
        // Predicated region
        $region65: #{baseline_model_forward.1} parent=55 // pred_check
          %p382 = pneg %p381
        $region66: #{baseline_model_forward.1} parent=55 // pred_check_branch
          %384 = sbr.rel (%p382) target = $region68
        $region67: #{baseline_model_forward.1} parent=55 // pred_region
          #allocation13 [shape = 'u32[9]{0}', space=smem, size = 0x24, scoped, tag = 'DMA stride descriptor']
          #allocation16 [shape = 'u32[9]{0}', space=smem, size = 0x24, scoped, tag = 'DMA stride descriptor']
          %v385 = vld [vmem:[%s2] sm:$0x3]
          %v387 = vlaneseq
          %v388 = vshrl.u32 %v387, 7
          %v389 = vsub.s32 0, %v388
          %v390 = vrot.slane %v385, %v389
          %v391 = vlaneseq
          %v392 = vshrl.u32 %v391, 7
          %v393 = vsub.s32 1, %v392
          %v394 = vrot.slane %v385, %v393
          %397 = vst [vmem:[#allocation2] sm:$0xff] %v390
          %398 = vst [vmem:[#allocation2 + $0x8] sm:$0xff] %v394
          %s400 = sshll.u32 1, 14
          %s401 = sxor.u32 4294967295, %s400
          %s403 = sld [smem:[#allocation0]]
          %s404 = sadd.s32 2, %s403
          %s406 = sshll.u32 7, 26
          %s407 = sxor.u32 4294967295, %s406
          %s408 = sand.u32 0, %s407
          %s409 = sshll.u32 %s404, 26
          %s410 = sor.u32 %s408, %s409
          %s411 = sshll.u32 [#allocation4], 4
          %s412 = int_to_ptr.vmem [resolvable:$true] %s411
          %415 = sst [smem:[#allocation13]] 256
          %s416 = scalar_lea.smem [#allocation13], 1
          %417 = sst [smem:[%s416]] 256
          %s418 = scalar_lea.smem [#allocation13], 2
          %419 = sst [smem:[%s418]] 2
          %s420 = scalar_lea.smem [#allocation13], 3
          %421 = sst [smem:[%s420]] 64
          %s422 = scalar_lea.smem [#allocation13], 4
          %423 = sst [smem:[%s422]] 128
          %s424 = scalar_lea.smem [#allocation13], 5
          %425 = sst [smem:[%s424]] 2
          %s426 = scalar_lea.smem [#allocation13], 6
          %427 = sst [smem:[%s426]] 128
          %s428 = scalar_lea.smem [#allocation13], 7
          %429 = sst [smem:[%s428]] 64
          %s430 = scalar_lea.smem [#allocation13], 8
          %431 = sst [smem:[%s430]] 4
          %433 = dma.general %s4, 4096, %s412, [#allocation7], [#allocation12], [#allocation13], %s410, 0
          %s434 = scalar_lea.sflag [#allocation7], 1
          %p436 = scmp.lt.u32.totalorder 32, 8
          %p437 = pneg %p436
          // Predicated region
          $region69: #{baseline_model_forward.1} parent=67 // pred_check
            _
          $region70: #{baseline_model_forward.1} parent=67 // pred_check_branch
            %439 = sbr.rel (%p436) target = $region72
          $region71: #{baseline_model_forward.1} parent=67 // pred_region
            %s454 = sand.u32 32, 7
            %p455 = scmp.eq.s32.totalorder %s454, 0
            // Predicated region
            $region84: #{baseline_model_forward.1} parent=71 // pred_check
              %p456 = pneg %p455
            $region85: #{baseline_model_forward.1} parent=71 // pred_check_branch
              %458 = sbr.rel (%p456) target = $region87
            $region86: #{baseline_model_forward.1} parent=71 // pred_region
              loop: start=0, step=1, limit=1
              $region88: #{baseline_model_forward.1} parent=86 // loop_pre_header
                _
              $region89: #{baseline_model_forward.1} parent=86 // loop_header
                %s460 = sphi 0, %s464
                %p461 = scmp.ge.s32.totalorder %s460, 1
                %s465 = sphi %s6, %s6
                %s466 = sphi [#allocation5], [#allocation5]
              $region90: #{baseline_model_forward.1} parent=86 // loop_header_branch
                %463 = sbr.rel (%p461) target = $region94
              $region91: #{baseline_model_forward.1} parent=86 // loop_body
                %v467 = vld [vmem:[%s465] sm:$0xff]
                %468 = vst [vmem:[%s466] sm:$0xff] %v467
                %v469 = vld [vmem:[%s465 + $0x8] sm:$0xff]
                %470 = vst [vmem:[%s466 + $0x8] sm:$0xff] %v469
                %v471 = vld [vmem:[%s465 + $0x10] sm:$0xff]
                %472 = vst [vmem:[%s466 + $0x10] sm:$0xff] %v471
                %v473 = vld [vmem:[%s465 + $0x18] sm:$0xff]
                %474 = vst [vmem:[%s466 + $0x18] sm:$0xff] %v473
              $region92: #{baseline_model_forward.1} parent=86 // loop_footer
                %s464 = sadd.s32 1, %s460
              $region93: #{baseline_model_forward.1} parent=86 // loop_footer_branch
                %459 = sbr.rel target = $region89
              $region94: #{baseline_model_forward.1} parent=86 // loop_exit
                _
            $region87: #{baseline_model_forward.1} parent=71 // pred_fallthru
              _
            %p475 = pneg %p455
            // Predicated region
            $region95: #{baseline_model_forward.1} parent=71 // pred_check
              _
            $region96: #{baseline_model_forward.1} parent=71 // pred_check_branch
              %477 = sbr.rel (%p455) target = $region98
            $region97: #{baseline_model_forward.1} parent=71 // pred_region
              %s478 = sand.u32 32, 7
            $region98: #{baseline_model_forward.1} parent=71 // pred_fallthru
              _
          $region72: #{baseline_model_forward.1} parent=67 // pred_fallthru
            _
          // Predicated region
          $region73: #{baseline_model_forward.1} parent=67 // pred_check
            %p440 = pneg %p436
          $region74: #{baseline_model_forward.1} parent=67 // pred_check_branch
            %442 = sbr.rel (%p440) target = $region76
          $region75: #{baseline_model_forward.1} parent=67 // pred_region
            %s443 = sshllo.u32 0, 32
            loop: start=0, step=1, limit=1
            $region77: #{baseline_model_forward.1} parent=75 // loop_pre_header
              _
            $region78: #{baseline_model_forward.1} parent=75 // loop_header
              %s445 = sphi 0, %s449
              %p446 = scmp.ge.s32.totalorder %s445, 1
              %s450 = sphi %s6, %s6
              %s451 = sphi [#allocation5], [#allocation5]
            $region79: #{baseline_model_forward.1} parent=75 // loop_header_branch
              %448 = sbr.rel (%p446) target = $region83
            $region80: #{baseline_model_forward.1} parent=75 // loop_body
              %v452 = vld [vmem:[%s450] sm:%s443]
              %453 = vst [vmem:[%s451] sm:%s443] %v452
            $region81: #{baseline_model_forward.1} parent=75 // loop_footer
              %s449 = sadd.s32 1, %s445
            $region82: #{baseline_model_forward.1} parent=75 // loop_footer_branch
              %444 = sbr.rel target = $region78
            $region83: #{baseline_model_forward.1} parent=75 // loop_exit
              _
          $region76: #{baseline_model_forward.1} parent=67 // pred_fallthru
            _
          // Predicated region
          $region99: #{baseline_model_forward.1} parent=67 // pred_check
            _
          $region100: #{baseline_model_forward.1} parent=67 // pred_check_branch
            %481 = sbr.rel (0) target = $region102
          $region101: #{baseline_model_forward.1} parent=67 // pred_region
            %482 = vsyncadd %s434, 512
          $region102: #{baseline_model_forward.1} parent=67 // pred_fallthru
            _
          %s483 = scalar_lea.sflag [#allocation7], 2
          %s485 = sshll.u32 1, 14
          %s486 = sxor.u32 4294967295, %s485
          %s488 = sadd.s32 2, %s403
          %s490 = sshll.u32 7, 26
          %s491 = sxor.u32 4294967295, %s490
          %s492 = sand.u32 0, %s491
          %s493 = sshll.u32 %s488, 26
          %s494 = sor.u32 %s492, %s493
          %s495 = sshll.u32 [#allocation6], 4
          %s496 = int_to_ptr.vmem [resolvable:$true] %s495
          %499 = sst [smem:[#allocation16]] 384
          %s500 = scalar_lea.smem [#allocation16], 1
          %501 = sst [smem:[%s500]] 384
          %s502 = scalar_lea.smem [#allocation16], 2
          %503 = sst [smem:[%s502]] 3
          %s504 = scalar_lea.smem [#allocation16], 3
          %505 = sst [smem:[%s504]] 64
          %s506 = scalar_lea.smem [#allocation16], 4
          %507 = sst [smem:[%s506]] 128
          %s508 = scalar_lea.smem [#allocation16], 5
          %509 = sst [smem:[%s508]] 2
          %s510 = scalar_lea.smem [#allocation16], 6
          %511 = sst [smem:[%s510]] 192
          %s512 = scalar_lea.smem [#allocation16], 7
          %513 = sst [smem:[%s512]] 64
          %s514 = scalar_lea.smem [#allocation16], 8
          %515 = sst [smem:[%s514]] 4
          %517 = dma.general %s8, 9216, %s496, %s483, [#allocation15], [#allocation16], %s494, 0
        $region68: #{baseline_model_forward.1} parent=55 // pred_fallthru
          _
        %v518 = vld [vmem:[#allocation2] sm:$0xff]
        %v519 = vld [vmem:[#allocation2 + $0x8] sm:$0xff]
        %v520 = vld [vmem:[%s377] sm:$0xff]
        %v521 = vld [vmem:[%s377 + $0x8] sm:$0xff]
        %v522 = vld [vmem:[%s334] sm:$0xff]
        %v523 = vld [vmem:[%s334 + $0x8] sm:$0xff]
        %v524 = vld [vmem:[%s334 + $0x10] sm:$0xff]
        %v525 = vld [vmem:[%s334 + $0x18] sm:$0xff]
        %v526 = vld [vmem:[%s334 + $0x20] sm:$0xff]
        %v527 = vld [vmem:[%s334 + $0x28] sm:$0xff]
        %v528 = vld [vmem:[%s334 + $0x30] sm:$0xff]
        %v529 = vld [vmem:[%s334 + $0x38] sm:$0xff]
        %v530 = vld [vmem:[%s334 + $0x40] sm:$0xff]
        %v531 = vld [vmem:[%s334 + $0x48] sm:$0xff]
        %v532 = vld [vmem:[%s334 + $0x50] sm:$0xff]
        %v533 = vld [vmem:[%s334 + $0x58] sm:$0xff]
        %v534 = vld [vmem:[%s334 + $0x60] sm:$0xff]
        %v535 = vld [vmem:[%s334 + $0x68] sm:$0xff]
        %v536 = vld [vmem:[%s334 + $0x70] sm:$0xff]
        %v537 = vld [vmem:[%s334 + $0x78] sm:$0xff]
        %v538 = vld [vmem:[%s334 + $0x80] sm:$0xff]
        %v539 = vld [vmem:[%s334 + $0x88] sm:$0xff]
        %v540 = vld [vmem:[%s334 + $0x90] sm:$0xff]
        %v541 = vld [vmem:[%s334 + $0x98] sm:$0xff]
        %v542 = vld [vmem:[%s334 + $0xa0] sm:$0xff]
        %v543 = vld [vmem:[%s334 + $0xa8] sm:$0xff]
        %v544 = vld [vmem:[%s334 + $0xb0] sm:$0xff]
        %v545 = vld [vmem:[%s334 + $0xb8] sm:$0xff]
        %v546 = vld [vmem:[%s334 + $0xc0] sm:$0xff]
        %v547 = vld [vmem:[%s334 + $0xc8] sm:$0xff]
        %v548 = vld [vmem:[%s334 + $0xd0] sm:$0xff]
        %v549 = vld [vmem:[%s334 + $0xd8] sm:$0xff]
        %v550 = vld [vmem:[%s334 + $0xe0] sm:$0xff]
        %v551 = vld [vmem:[%s334 + $0xe8] sm:$0xff]
        %v552 = vld [vmem:[%s334 + $0xf0] sm:$0xff]
        %v553 = vld [vmem:[%s334 + $0xf8] sm:$0xff]
        %v554 = vunpack.c.l.s8.bf16 %v522
        %v555 = vunpack.c.l.s8.bf16 %v523
        %v556 = vunpack.c.h.s8.bf16 %v522
        %v557 = vunpack.c.h.s8.bf16 %v523
        %v558 = vunpack.c.l.s8.bf16 %v524
        %v559 = vunpack.c.l.s8.bf16 %v525
        %v560 = vunpack.c.h.s8.bf16 %v524
        %v561 = vunpack.c.h.s8.bf16 %v525
        %v562 = vunpack.c.l.s8.bf16 %v526
        %v563 = vunpack.c.l.s8.bf16 %v527
        %v564 = vunpack.c.h.s8.bf16 %v526
        %v565 = vunpack.c.h.s8.bf16 %v527
        %v566 = vunpack.c.l.s8.bf16 %v528
        %v567 = vunpack.c.l.s8.bf16 %v529
        %v568 = vunpack.c.h.s8.bf16 %v528
        %v569 = vunpack.c.h.s8.bf16 %v529
        %v570 = vunpack.c.l.s8.bf16 %v530
        %v571 = vunpack.c.l.s8.bf16 %v531
        %v572 = vunpack.c.h.s8.bf16 %v530
        %v573 = vunpack.c.h.s8.bf16 %v531
        %v574 = vunpack.c.l.s8.bf16 %v532
        %v575 = vunpack.c.l.s8.bf16 %v533
        %v576 = vunpack.c.h.s8.bf16 %v532
        %v577 = vunpack.c.h.s8.bf16 %v533
        %v578 = vunpack.c.l.s8.bf16 %v534
        %v579 = vunpack.c.l.s8.bf16 %v535
        %v580 = vunpack.c.h.s8.bf16 %v534
        %v581 = vunpack.c.h.s8.bf16 %v535
        %v582 = vunpack.c.l.s8.bf16 %v536
        %v583 = vunpack.c.l.s8.bf16 %v537
        %v584 = vunpack.c.h.s8.bf16 %v536
        %v585 = vunpack.c.h.s8.bf16 %v537
        %v586 = vunpack.c.l.s8.bf16 %v538
        %v587 = vunpack.c.l.s8.bf16 %v539
        %v588 = vunpack.c.h.s8.bf16 %v538
        %v589 = vunpack.c.h.s8.bf16 %v539
        %v590 = vunpack.c.l.s8.bf16 %v540
        %v591 = vunpack.c.l.s8.bf16 %v541
        %v592 = vunpack.c.h.s8.bf16 %v540
        %v593 = vunpack.c.h.s8.bf16 %v541
        %v594 = vunpack.c.l.s8.bf16 %v542
        %v595 = vunpack.c.l.s8.bf16 %v543
        %v596 = vunpack.c.h.s8.bf16 %v542
        %v597 = vunpack.c.h.s8.bf16 %v543
        %v598 = vunpack.c.l.s8.bf16 %v544
        %v599 = vunpack.c.l.s8.bf16 %v545
        %v600 = vunpack.c.h.s8.bf16 %v544
        %v601 = vunpack.c.h.s8.bf16 %v545
        %v602 = vunpack.c.l.s8.bf16 %v546
        %v603 = vunpack.c.l.s8.bf16 %v547
        %v604 = vunpack.c.h.s8.bf16 %v546
        %v605 = vunpack.c.h.s8.bf16 %v547
        %v606 = vunpack.c.l.s8.bf16 %v548
        %v607 = vunpack.c.l.s8.bf16 %v549
        %v608 = vunpack.c.h.s8.bf16 %v548
        %v609 = vunpack.c.h.s8.bf16 %v549
        %v610 = vunpack.c.l.s8.bf16 %v550
        %v611 = vunpack.c.l.s8.bf16 %v551
        %v612 = vunpack.c.h.s8.bf16 %v550
        %v613 = vunpack.c.h.s8.bf16 %v551
        %v614 = vunpack.c.l.s8.bf16 %v552
        %v615 = vunpack.c.l.s8.bf16 %v553
        %v616 = vunpack.c.h.s8.bf16 %v552
        %v617 = vunpack.c.h.s8.bf16 %v553
        %v620 = vunpack.c.l.b16 %v520
        %v621 = vunpack.c.h.b16 %v520
        %v622 = vunpack.c.l.b16 %v521
        %v623 = vunpack.c.h.b16 %v521
        %v624 = vpack.c.b16 %v620, %v620
        %v625 = vpack.c.b16 %v621, %v621
        %v626 = vpack.c.b16 %v622, %v622
        %v627 = vpack.c.b16 %v623, %v623
        %632 = vmatprep.subr.bf16.mxu0 %v555
        %633 = vmatpush1.bf16.msra.mxu0 %v554
        %634 = vmatprep.subr.bf16.mxu0 %v557
        %635 = vmatpush1.bf16.msra.mxu0 %v556
        %636 = vmatprep.subr.bf16.mxu0 %v559
        %637 = vmatpush1.bf16.msra.mxu0 %v558
        %638 = vmatprep.subr.bf16.mxu0 %v561
        %639 = vmatpush1.bf16.msra.mxu0 %v560
        %640 = vmatprep.subr.bf16.mxu0 %v563
        %641 = vmatpush1.bf16.msra.mxu0 %v562
        %642 = vmatprep.subr.bf16.mxu0 %v565
        %643 = vmatpush1.bf16.msra.mxu0 %v564
        %644 = vmatprep.subr.bf16.mxu0 %v567
        %645 = vmatpush1.bf16.msra.mxu0 %v566
        %646 = vmatprep.subr.bf16.mxu0 %v569
        %647 = vmatpush1.bf16.msra.mxu0 %v568
        %648 = vmatprep.subr.bf16.mxu0 %v571
        %649 = vmatpush1.bf16.msra.mxu0 %v570
        %650 = vmatprep.subr.bf16.mxu0 %v573
        %651 = vmatpush1.bf16.msra.mxu0 %v572
        %652 = vmatprep.subr.bf16.mxu0 %v575
        %653 = vmatpush1.bf16.msra.mxu0 %v574
        %654 = vmatprep.subr.bf16.mxu0 %v577
        %655 = vmatpush1.bf16.msra.mxu0 %v576
        %656 = vmatprep.subr.bf16.mxu0 %v579
        %657 = vmatpush1.bf16.msra.mxu0 %v578
        %658 = vmatprep.subr.bf16.mxu0 %v581
        %659 = vmatpush1.bf16.msra.mxu0 %v580
        %660 = vmatprep.subr.bf16.mxu0 %v583
        %661 = vmatpush1.bf16.msra.mxu0 %v582
        %662 = vmatprep.subr.bf16.mxu0 %v585
        %663 = vmatpush1.bf16.msra.mxu0 %v584
        %664 = vmatprep.mubr.bf16.mxu0 %v625
        %665 = vmatmul.mubr.bf16.gmra.mrb[0].mxu0 %v624
        %v666 = vpop.f32.mrb[0].mxu0
        %v667 = vadd.f32 0.0, %v666
        %v668 = vpop.f32.mrb[0].mxu0
        %v669 = vadd.f32 0.0, %v668
        %v670 = vpop.f32.mrb[0].mxu0
        %v671 = vpop.f32.mrb[0].mxu0
        %672 = vdwg.mxu0
        %673 = vmatprep.subr.bf16.mxu0 %v587
        %674 = vmatpush1.bf16.msra.mxu0 %v586
        %675 = vmatprep.subr.bf16.mxu0 %v589
        %676 = vmatpush1.bf16.msra.mxu0 %v588
        %677 = vmatprep.subr.bf16.mxu0 %v591
        %678 = vmatpush1.bf16.msra.mxu0 %v590
        %679 = vmatprep.subr.bf16.mxu0 %v593
        %680 = vmatpush1.bf16.msra.mxu0 %v592
        %681 = vmatprep.subr.bf16.mxu0 %v595
        %682 = vmatpush1.bf16.msra.mxu0 %v594
        %683 = vmatprep.subr.bf16.mxu0 %v597
        %684 = vmatpush1.bf16.msra.mxu0 %v596
        %685 = vmatprep.subr.bf16.mxu0 %v599
        %686 = vmatpush1.bf16.msra.mxu0 %v598
        %687 = vmatprep.subr.bf16.mxu0 %v601
        %688 = vmatpush1.bf16.msra.mxu0 %v600
        %689 = vmatprep.subr.bf16.mxu0 %v603
        %690 = vmatpush1.bf16.msra.mxu0 %v602
        %691 = vmatprep.subr.bf16.mxu0 %v605
        %692 = vmatpush1.bf16.msra.mxu0 %v604
        %693 = vmatprep.subr.bf16.mxu0 %v607
        %694 = vmatpush1.bf16.msra.mxu0 %v606
        %695 = vmatprep.subr.bf16.mxu0 %v609
        %696 = vmatpush1.bf16.msra.mxu0 %v608
        %697 = vmatprep.subr.bf16.mxu0 %v611
        %698 = vmatpush1.bf16.msra.mxu0 %v610
        %699 = vmatprep.subr.bf16.mxu0 %v613
        %700 = vmatpush1.bf16.msra.mxu0 %v612
        %701 = vmatprep.subr.bf16.mxu0 %v615
        %702 = vmatpush1.bf16.msra.mxu0 %v614
        %703 = vmatprep.subr.bf16.mxu0 %v617
        %704 = vmatpush1.bf16.msra.mxu0 %v616
        %705 = vmatprep.mubr.bf16.mxu0 %v627
        %706 = vmatmul.mubr.bf16.gmra.mrb[0].mxu0 %v626
        %v707 = vpop.f32.mrb[0].mxu0
        %v708 = vadd.f32 %v667, %v707
        %v709 = vpop.f32.mrb[0].mxu0
        %v710 = vadd.f32 %v669, %v709
        %v711 = vpop.f32.mrb[0].mxu0
        %v712 = vpop.f32.mrb[0].mxu0
        %713 = vdwg.mxu0
        %v714 = vadd.f32 %v518, %v708
        %v715 = vadd.f32 %v519, %v710
        %716 = vst [vmem:[#allocation2] sm:$0xff] %v714
        %717 = vst [vmem:[#allocation2 + $0x8] sm:$0xff] %v715
        %p718 = scmp.eq.s32.totalorder %s27, 1
        // Predicated region
        $region103: #{baseline_model_forward.1} parent=55 // pred_check
          %p719 = pneg %p718
        $region104: #{baseline_model_forward.1} parent=55 // pred_check_branch
          %721 = sbr.rel (%p719) target = $region106
        $region105: #{baseline_model_forward.1} parent=55 // pred_region
          %s722 = smul.u32 4, 32
          %s723 = smul.u32 %s722, 2
          %s724 = sshll.u32 %s723, 4
          %725 = dma.done [#allocation7], %s724
          %s726 = scalar_lea.sflag [#allocation7], 1
          %s727 = smul.u32 4, 8
          %s728 = smul.u32 %s727, 1
          %s729 = smul.u32 %s728, 1
          %s730 = sshll.u32 %s729, 4
          %731 = dma.done %s726, %s730
          %s732 = scalar_lea.sflag [#allocation7], 2
          %s733 = smul.u32 4, 48
          %s734 = smul.u32 %s733, 3
          %s735 = sshll.u32 %s734, 4
          %736 = dma.done %s732, %s735
          %v737 = vld [vmem:[#allocation2] sm:$0xff]
          %v738 = vld [vmem:[#allocation2 + $0x8] sm:$0xff]
          %v739 = vld [vmem:[%s3] sm:$0x3]
          %v741 = vlaneseq
          %v742 = vshrl.u32 %v741, 7
          %v743 = vsub.s32 0, %v742
          %v744 = vrot.slane %v739, %v743
          %v745 = vlaneseq
          %v746 = vshrl.u32 %v745, 7
          %v747 = vsub.s32 1, %v746
          %v748 = vrot.slane %v739, %v747
          %v751 = vmul.f32 %v737, %v744
          %v752 = vmul.f32 %v738, %v748
          %v753 = vmax.f32 %v751, 0.0
          %v754 = vmax.f32 %v752, 0.0
          %v755 = vpack.c.bf16 %v753, %v753
          %v756 = vpack.c.bf16 %v754, %v754
          %v757 = vld [vmem:[#allocation4] sm:$0xff]
          %v758 = vld [vmem:[#allocation4 + $0x8] sm:$0xff]
          %v759 = vld [vmem:[#allocation4 + $0x10] sm:$0xff]
          %v760 = vld [vmem:[#allocation4 + $0x18] sm:$0xff]
          %v761 = vld [vmem:[#allocation4 + $0x20] sm:$0xff]
          %v762 = vld [vmem:[#allocation4 + $0x28] sm:$0xff]
          %v763 = vld [vmem:[#allocation4 + $0x30] sm:$0xff]
          %v764 = vld [vmem:[#allocation4 + $0x38] sm:$0xff]
          %v765 = vld [vmem:[#allocation4 + $0x40] sm:$0xff]
          %v766 = vld [vmem:[#allocation4 + $0x48] sm:$0xff]
          %v767 = vld [vmem:[#allocation4 + $0x50] sm:$0xff]
          %v768 = vld [vmem:[#allocation4 + $0x58] sm:$0xff]
          %v769 = vld [vmem:[#allocation4 + $0x60] sm:$0xff]
          %v770 = vld [vmem:[#allocation4 + $0x68] sm:$0xff]
          %v771 = vld [vmem:[#allocation4 + $0x70] sm:$0xff]
          %v772 = vld [vmem:[#allocation4 + $0x78] sm:$0xff]
          %v773 = vld [vmem:[#allocation4 + $0x80] sm:$0xff]
          %v774 = vld [vmem:[#allocation4 + $0x88] sm:$0xff]
          %v775 = vld [vmem:[#allocation4 + $0x90] sm:$0xff]
          %v776 = vld [vmem:[#allocation4 + $0x98] sm:$0xff]
          %v777 = vld [vmem:[#allocation4 + $0xa0] sm:$0xff]
          %v778 = vld [vmem:[#allocation4 + $0xa8] sm:$0xff]
          %v779 = vld [vmem:[#allocation4 + $0xb0] sm:$0xff]
          %v780 = vld [vmem:[#allocation4 + $0xb8] sm:$0xff]
          %v781 = vld [vmem:[#allocation4 + $0xc0] sm:$0xff]
          %v782 = vld [vmem:[#allocation4 + $0xc8] sm:$0xff]
          %v783 = vld [vmem:[#allocation4 + $0xd0] sm:$0xff]
          %v784 = vld [vmem:[#allocation4 + $0xd8] sm:$0xff]
          %v785 = vld [vmem:[#allocation4 + $0xe0] sm:$0xff]
          %v786 = vld [vmem:[#allocation4 + $0xe8] sm:$0xff]
          %v787 = vld [vmem:[#allocation4 + $0xf0] sm:$0xff]
          %v788 = vld [vmem:[#allocation4 + $0xf8] sm:$0xff]
          %v789 = vld [vmem:[%s5] sm:$0x3]
          %v791 = vlaneseq
          %v792 = vshrl.u32 %v791, 7
          %v793 = vsub.s32 0, %v792
          %v794 = vrot.slane %v789, %v793
          %v795 = vlaneseq
          %v796 = vshrl.u32 %v795, 7
          %v797 = vsub.s32 1, %v796
          %v798 = vrot.slane %v789, %v797
          %801 = vmatprep.subr.bf16.mxu0 %v758
          %802 = vmatpush1.bf16.msra.mxu0 %v757
          %803 = vmatprep.subr.bf16.mxu0 %v760
          %804 = vmatpush1.bf16.msra.mxu0 %v759
          %805 = vmatprep.subr.bf16.mxu0 %v762
          %806 = vmatpush1.bf16.msra.mxu0 %v761
          %807 = vmatprep.subr.bf16.mxu0 %v764
          %808 = vmatpush1.bf16.msra.mxu0 %v763
          %809 = vmatprep.subr.bf16.mxu0 %v766
          %810 = vmatpush1.bf16.msra.mxu0 %v765
          %811 = vmatprep.subr.bf16.mxu0 %v768
          %812 = vmatpush1.bf16.msra.mxu0 %v767
          %813 = vmatprep.subr.bf16.mxu0 %v770
          %814 = vmatpush1.bf16.msra.mxu0 %v769
          %815 = vmatprep.subr.bf16.mxu0 %v772
          %816 = vmatpush1.bf16.msra.mxu0 %v771
          %817 = vmatprep.subr.bf16.mxu0 %v774
          %818 = vmatpush1.bf16.msra.mxu0 %v773
          %819 = vmatprep.subr.bf16.mxu0 %v776
          %820 = vmatpush1.bf16.msra.mxu0 %v775
          %821 = vmatprep.subr.bf16.mxu0 %v778
          %822 = vmatpush1.bf16.msra.mxu0 %v777
          %823 = vmatprep.subr.bf16.mxu0 %v780
          %824 = vmatpush1.bf16.msra.mxu0 %v779
          %825 = vmatprep.subr.bf16.mxu0 %v782
          %826 = vmatpush1.bf16.msra.mxu0 %v781
          %827 = vmatprep.subr.bf16.mxu0 %v784
          %828 = vmatpush1.bf16.msra.mxu0 %v783
          %829 = vmatprep.subr.bf16.mxu0 %v786
          %830 = vmatpush1.bf16.msra.mxu0 %v785
          %831 = vmatprep.subr.bf16.mxu0 %v788
          %832 = vmatpush1.bf16.msra.mxu0 %v787
          %833 = vmatprep.mubr.bf16.mxu0 %v756
          %834 = vmatmul.mubr.bf16.gmra.mrb[0].mxu0 %v755
          %v835 = vpop.f32.mrb[0].mxu0
          %v836 = vadd.f32 %v794, %v835
          %v837 = vpop.f32.mrb[0].mxu0
          %v838 = vadd.f32 %v798, %v837
          %v839 = vpop.f32.mrb[0].mxu0
          %v840 = vpop.f32.mrb[0].mxu0
          %841 = vdwg.mxu0
          %v842 = vld [vmem:[#allocation5] sm:$0xf]
          %v843 = vld [vmem:[#allocation5 + $0x4] sm:$0xf]
          %v844 = vld [vmem:[#allocation5 + $0x8] sm:$0xf]
          %v845 = vld [vmem:[#allocation5 + $0xc] sm:$0xf]
          %v846 = vld [vmem:[#allocation5 + $0x10] sm:$0xf]
          %v847 = vld [vmem:[#allocation5 + $0x14] sm:$0xf]
          %v848 = vld [vmem:[#allocation5 + $0x18] sm:$0xf]
          %v849 = vld [vmem:[#allocation5 + $0x1c] sm:$0xf]
          %v850 = vunpack.c.l.bf16 %v842
          %v851 = vunpack.c.l.bf16 %v843
          %v852 = vunpack.c.l.bf16 %v844
          %v853 = vunpack.c.l.bf16 %v845
          %v854 = vunpack.c.l.bf16 %v846
          %v855 = vunpack.c.l.bf16 %v847
          %v856 = vunpack.c.l.bf16 %v848
          %v857 = vunpack.c.l.bf16 %v849
          %v858 = vld [vmem:[%s7] sm:$0xff]
          %v859 = vlaneseq
          %v860 = vshrl.u32 %v859, 7
          %v861 = vsub.s32 0, %v860
          %v862 = vrot.slane %v858, %v861
          %864 = vbcast.lane.b32.xlu0 %v862, 256
          %v865 = vpop.permute.xlu0 %864
          %v866 = vlaneseq
          %v867 = vshrl.u32 %v866, 7
          %v868 = vsub.s32 1, %v867
          %v869 = vrot.slane %v858, %v868
          %871 = vbcast.lane.b32.xlu0 %v869, 256
          %v872 = vpop.permute.xlu0 %871
          %v873 = vlaneseq
          %v874 = vshrl.u32 %v873, 7
          %v875 = vsub.s32 2, %v874
          %v876 = vrot.slane %v858, %v875
          %878 = vbcast.lane.b32.xlu0 %v876, 256
          %v879 = vpop.permute.xlu0 %878
          %v880 = vlaneseq
          %v881 = vshrl.u32 %v880, 7
          %v882 = vsub.s32 3, %v881
          %v883 = vrot.slane %v858, %v882
          %885 = vbcast.lane.b32.xlu0 %v883, 256
          %v886 = vpop.permute.xlu0 %885
          %v887 = vlaneseq
          %v888 = vshrl.u32 %v887, 7
          %v889 = vsub.s32 4, %v888
          %v890 = vrot.slane %v858, %v889
          %892 = vbcast.lane.b32.xlu0 %v890, 256
          %v893 = vpop.permute.xlu0 %892
          %v894 = vlaneseq
          %v895 = vshrl.u32 %v894, 7
          %v896 = vsub.s32 5, %v895
          %v897 = vrot.slane %v858, %v896
          %899 = vbcast.lane.b32.xlu0 %v897, 256
          %v900 = vpop.permute.xlu0 %899
          %v901 = vlaneseq
          %v902 = vshrl.u32 %v901, 7
          %v903 = vsub.s32 6, %v902
          %v904 = vrot.slane %v858, %v903
          %906 = vbcast.lane.b32.xlu0 %v904, 256
          %v907 = vpop.permute.xlu0 %906
          %v908 = vlaneseq
          %v909 = vshrl.u32 %v908, 7
          %v910 = vsub.s32 7, %v909
          %v911 = vrot.slane %v858, %v910
          %913 = vbcast.lane.b32.xlu0 %v911, 256
          %v914 = vpop.permute.xlu0 %913
          %v915 = vmul.f32 %v850, %v865
          %v916 = vmul.f32 %v851, %v872
          %v917 = vmul.f32 %v852, %v879
          %v918 = vmul.f32 %v853, %v886
          %v919 = vmul.f32 %v854, %v893
          %v920 = vmul.f32 %v855, %v900
          %v921 = vmul.f32 %v856, %v907
          %v922 = vmul.f32 %v857, %v914
          %v923 = vrot.slane %v915, 4
          %v924 = vadd.f32 %v915, %v923
          %v925 = vrot.slane %v924, 2
          %v926 = vadd.f32 %v924, %v925
          %v927 = vrot.slane %v926, 1
          %v928 = vadd.f32 %v926, %v927
          %v929 = vrot.slane %v916, 4
          %v930 = vadd.f32 %v916, %v929
          %v931 = vrot.slane %v930, 2
          %v932 = vadd.f32 %v930, %v931
          %v933 = vrot.slane %v932, 1
          %v934 = vadd.f32 %v932, %v933
          %v935 = vrot.slane %v917, 4
          %v936 = vadd.f32 %v917, %v935
          %v937 = vrot.slane %v936, 2
          %v938 = vadd.f32 %v936, %v937
          %v939 = vrot.slane %v938, 1
          %v940 = vadd.f32 %v938, %v939
          %v941 = vrot.slane %v918, 4
          %v942 = vadd.f32 %v918, %v941
          %v943 = vrot.slane %v942, 2
          %v944 = vadd.f32 %v942, %v943
          %v945 = vrot.slane %v944, 1
          %v946 = vadd.f32 %v944, %v945
          %v947 = vrot.slane %v919, 4
          %v948 = vadd.f32 %v919, %v947
          %v949 = vrot.slane %v948, 2
          %v950 = vadd.f32 %v948, %v949
          %v951 = vrot.slane %v950, 1
          %v952 = vadd.f32 %v950, %v951
          %v953 = vrot.slane %v920, 4
          %v954 = vadd.f32 %v920, %v953
          %v955 = vrot.slane %v954, 2
          %v956 = vadd.f32 %v954, %v955
          %v957 = vrot.slane %v956, 1
          %v958 = vadd.f32 %v956, %v957
          %v959 = vrot.slane %v921, 4
          %v960 = vadd.f32 %v921, %v959
          %v961 = vrot.slane %v960, 2
          %v962 = vadd.f32 %v960, %v961
          %v963 = vrot.slane %v962, 1
          %v964 = vadd.f32 %v962, %v963
          %v965 = vrot.slane %v922, 4
          %v966 = vadd.f32 %v922, %v965
          %v967 = vrot.slane %v966, 2
          %v968 = vadd.f32 %v966, %v967
          %v969 = vrot.slane %v968, 1
          %v970 = vadd.f32 %v968, %v969
          %v971 = vrot.slane %v865, 4
          %v972 = vadd.f32 %v865, %v971
          %v973 = vrot.slane %v972, 2
          %v974 = vadd.f32 %v972, %v973
          %v975 = vrot.slane %v974, 1
          %v976 = vadd.f32 %v974, %v975
          %v977 = vrot.slane %v872, 4
          %v978 = vadd.f32 %v872, %v977
          %v979 = vrot.slane %v978, 2
          %v980 = vadd.f32 %v978, %v979
          %v981 = vrot.slane %v980, 1
          %v982 = vadd.f32 %v980, %v981
          %v983 = vrot.slane %v879, 4
          %v984 = vadd.f32 %v879, %v983
          %v985 = vrot.slane %v984, 2
          %v986 = vadd.f32 %v984, %v985
          %v987 = vrot.slane %v986, 1
          %v988 = vadd.f32 %v986, %v987
          %v989 = vrot.slane %v886, 4
          %v990 = vadd.f32 %v886, %v989
          %v991 = vrot.slane %v990, 2
          %v992 = vadd.f32 %v990, %v991
          %v993 = vrot.slane %v992, 1
          %v994 = vadd.f32 %v992, %v993
          %v995 = vrot.slane %v893, 4
          %v996 = vadd.f32 %v893, %v995
          %v997 = vrot.slane %v996, 2
          %v998 = vadd.f32 %v996, %v997
          %v999 = vrot.slane %v998, 1
          %v1000 = vadd.f32 %v998, %v999
          %v1001 = vrot.slane %v900, 4
          %v1002 = vadd.f32 %v900, %v1001
          %v1003 = vrot.slane %v1002, 2
          %v1004 = vadd.f32 %v1002, %v1003
          %v1005 = vrot.slane %v1004, 1
          %v1006 = vadd.f32 %v1004, %v1005
          %v1007 = vrot.slane %v907, 4
          %v1008 = vadd.f32 %v907, %v1007
          %v1009 = vrot.slane %v1008, 2
          %v1010 = vadd.f32 %v1008, %v1009
          %v1011 = vrot.slane %v1010, 1
          %v1012 = vadd.f32 %v1010, %v1011
          %v1013 = vrot.slane %v914, 4
          %v1014 = vadd.f32 %v914, %v1013
          %v1015 = vrot.slane %v1014, 2
          %v1016 = vadd.f32 %v1014, %v1015
          %v1017 = vrot.slane %v1016, 1
          %v1018 = vadd.f32 %v1016, %v1017
          %v1019 = vmax.f32 %v976, 1e-09
          %v1020 = vmax.f32 %v982, 1e-09
          %v1021 = vmax.f32 %v988, 1e-09
          %v1022 = vmax.f32 %v994, 1e-09
          %v1023 = vmax.f32 %v1000, 1e-09
          %v1024 = vmax.f32 %v1006, 1e-09
          %v1025 = vmax.f32 %v1012, 1e-09
          %v1026 = vmax.f32 %v1018, 1e-09
          %v1027 = vrcp.pop %v1019
          %v1028 = vmul.f32 %v928, %v1027
          %v1029 = vrcp.pop %v1020
          %v1030 = vmul.f32 %v934, %v1029
          %v1031 = vrcp.pop %v1021
          %v1032 = vmul.f32 %v940, %v1031
          %v1033 = vrcp.pop %v1022
          %v1034 = vmul.f32 %v946, %v1033
          %v1035 = vrcp.pop %v1023
          %v1036 = vmul.f32 %v952, %v1035
          %v1037 = vrcp.pop %v1024
          %v1038 = vmul.f32 %v958, %v1037
          %v1039 = vrcp.pop %v1025
          %v1040 = vmul.f32 %v964, %v1039
          %v1041 = vrcp.pop %v1026
          %v1042 = vmul.f32 %v970, %v1041
          %v1043 = vmul.f32 %v1028, %v1028
          %v1044 = vmul.f32 %v1030, %v1030
          %v1045 = vmul.f32 %v1032, %v1032
          %v1046 = vmul.f32 %v1034, %v1034
          %v1047 = vmul.f32 %v1036, %v1036
          %v1048 = vmul.f32 %v1038, %v1038
          %v1049 = vmul.f32 %v1040, %v1040
          %v1050 = vmul.f32 %v1042, %v1042
          %vm1059 = vcmask 1041409
          %v1060 = vsel %vm1059, %v1044, %v1043
          %vm1061 = vcmask 1042434
          %v1062 = vsel %vm1061, %v1045, %v1060
          %vm1063 = vcmask 1043459
          %v1064 = vsel %vm1063, %v1046, %v1062
          %vm1065 = vcmask 1044484
          %v1066 = vsel %vm1065, %v1047, %v1064
          %vm1067 = vcmask 1045509
          %v1068 = vsel %vm1067, %v1048, %v1066
          %vm1069 = vcmask 1046534
          %v1070 = vsel %vm1069, %v1049, %v1068
          %vm1071 = vcmask 1047559
          %v1072 = vsel %vm1071, %v1050, %v1070
          %1074 = vadd.xlane.f32.xlu0 %v1072
          %v1075 = vpop.xlane.xlu0 %1074
          %v1076 = vmax.f32 %v1075, 1e-24
          %v1077 = vrsqrt.pop %v1076
          %v1079 = vrot.slane %v1077, 1
          %v1080 = vrot.slane %v1077, 2
          %v1081 = vrot.slane %v1077, 3
          %v1082 = vrot.slane %v1077, 4
          %v1083 = vrot.slane %v1077, 5
          %v1084 = vrot.slane %v1077, 6
          %v1085 = vrot.slane %v1077, 7
          %v1094 = vmul.f32 %v1028, %v1077
          %v1095 = vmul.f32 %v1030, %v1079
          %v1096 = vmul.f32 %v1032, %v1080
          %v1097 = vmul.f32 %v1034, %v1081
          %v1098 = vmul.f32 %v1036, %v1082
          %v1099 = vmul.f32 %v1038, %v1083
          %v1100 = vmul.f32 %v1040, %v1084
          %v1101 = vmul.f32 %v1042, %v1085
          %1102 = vst [vmem:[#allocation3] sm:$0xff] %v836
          %1103 = vst [vmem:[#allocation3 + $0x8] sm:$0xff] %v838
          %v1112 = vrot.slane %v1095, 7
          %v1113 = vsel %vm1059, %v1112, %v1094
          %v1114 = vrot.slane %v1096, 6
          %v1115 = vsel %vm1061, %v1114, %v1113
          %v1116 = vrot.slane %v1097, 5
          %v1117 = vsel %vm1063, %v1116, %v1115
          %v1118 = vrot.slane %v1098, 4
          %v1119 = vsel %vm1065, %v1118, %v1117
          %v1120 = vrot.slane %v1099, 3
          %v1121 = vsel %vm1067, %v1120, %v1119
          %v1122 = vrot.slane %v1100, 2
          %v1123 = vsel %vm1069, %v1122, %v1121
          %v1124 = vrot.slane %v1101, 1
          %v1125 = vsel %vm1071, %v1124, %v1123
          %1127 = vst [vmem:[#allocation3 + $0x10] sm:$0xff] %v1125
          %v1128 = vld [vmem:[#allocation3] sm:$0xff]
          %v1129 = vld [vmem:[#allocation3 + $0x8] sm:$0xff]
          %v1130 = vld [vmem:[#allocation3 + $0x10] sm:$0xff]
          %v1131 = vpack.c.bf16 %v1128, %v1128
          %v1132 = vpack.c.bf16 %v1129, %v1129
          %v1133 = vpack.c.bf16 %v1130, %v1130
          %v1134 = vld [vmem:[#allocation6] sm:$0xff]
          %v1135 = vld [vmem:[#allocation6 + $0x8] sm:$0xff]
          %v1136 = vld [vmem:[#allocation6 + $0x10] sm:$0xff]
          %v1137 = vld [vmem:[#allocation6 + $0x18] sm:$0xff]
          %v1138 = vld [vmem:[#allocation6 + $0x20] sm:$0xff]
          %v1139 = vld [vmem:[#allocation6 + $0x28] sm:$0xff]
          %v1140 = vld [vmem:[#allocation6 + $0x30] sm:$0xff]
          %v1141 = vld [vmem:[#allocation6 + $0x38] sm:$0xff]
          %v1142 = vld [vmem:[#allocation6 + $0x40] sm:$0xff]
          %v1143 = vld [vmem:[#allocation6 + $0x48] sm:$0xff]
          %v1144 = vld [vmem:[#allocation6 + $0x50] sm:$0xff]
          %v1145 = vld [vmem:[#allocation6 + $0x58] sm:$0xff]
          %v1146 = vld [vmem:[#allocation6 + $0x60] sm:$0xff]
          %v1147 = vld [vmem:[#allocation6 + $0x68] sm:$0xff]
          %v1148 = vld [vmem:[#allocation6 + $0x70] sm:$0xff]
          %v1149 = vld [vmem:[#allocation6 + $0x78] sm:$0xff]
          %v1150 = vld [vmem:[#allocation6 + $0x80] sm:$0xff]
          %v1151 = vld [vmem:[#allocation6 + $0x88] sm:$0xff]
          %v1152 = vld [vmem:[#allocation6 + $0x90] sm:$0xff]
          %v1153 = vld [vmem:[#allocation6 + $0x98] sm:$0xff]
          %v1154 = vld [vmem:[#allocation6 + $0xa0] sm:$0xff]
          %v1155 = vld [vmem:[#allocation6 + $0xa8] sm:$0xff]
          %v1156 = vld [vmem:[#allocation6 + $0xb0] sm:$0xff]
          %v1157 = vld [vmem:[#allocation6 + $0xb8] sm:$0xff]
          %v1158 = vld [vmem:[#allocation6 + $0xc0] sm:$0xff]
          %v1159 = vld [vmem:[#allocation6 + $0xc8] sm:$0xff]
          %v1160 = vld [vmem:[#allocation6 + $0xd0] sm:$0xff]
          %v1161 = vld [vmem:[#allocation6 + $0xd8] sm:$0xff]
          %v1162 = vld [vmem:[#allocation6 + $0xe0] sm:$0xff]
          %v1163 = vld [vmem:[#allocation6 + $0xe8] sm:$0xff]
          %v1164 = vld [vmem:[#allocation6 + $0xf0] sm:$0xff]
          %v1165 = vld [vmem:[#allocation6 + $0xf8] sm:$0xff]
          %v1166 = vld [vmem:[#allocation6 + $0x100] sm:$0xff]
          %v1167 = vld [vmem:[#allocation6 + $0x108] sm:$0xff]
          %v1168 = vld [vmem:[#allocation6 + $0x110] sm:$0xff]
          %v1169 = vld [vmem:[#allocation6 + $0x118] sm:$0xff]
          %v1170 = vld [vmem:[#allocation6 + $0x120] sm:$0xff]
          %v1171 = vld [vmem:[#allocation6 + $0x128] sm:$0xff]
          %v1172 = vld [vmem:[#allocation6 + $0x130] sm:$0xff]
          %v1173 = vld [vmem:[#allocation6 + $0x138] sm:$0xff]
          %v1174 = vld [vmem:[#allocation6 + $0x140] sm:$0xff]
          %v1175 = vld [vmem:[#allocation6 + $0x148] sm:$0xff]
          %v1176 = vld [vmem:[#allocation6 + $0x150] sm:$0xff]
          %v1177 = vld [vmem:[#allocation6 + $0x158] sm:$0xff]
          %v1178 = vld [vmem:[#allocation6 + $0x160] sm:$0xff]
          %v1179 = vld [vmem:[#allocation6 + $0x168] sm:$0xff]
          %v1180 = vld [vmem:[#allocation6 + $0x170] sm:$0xff]
          %v1181 = vld [vmem:[#allocation6 + $0x178] sm:$0xff]
          %v1182 = vld [vmem:[#allocation6 + $0x180] sm:$0xff]
          %v1183 = vld [vmem:[#allocation6 + $0x188] sm:$0xff]
          %v1184 = vld [vmem:[#allocation6 + $0x190] sm:$0xff]
          %v1185 = vld [vmem:[#allocation6 + $0x198] sm:$0xff]
          %v1186 = vld [vmem:[#allocation6 + $0x1a0] sm:$0xff]
          %v1187 = vld [vmem:[#allocation6 + $0x1a8] sm:$0xff]
          %v1188 = vld [vmem:[#allocation6 + $0x1b0] sm:$0xff]
          %v1189 = vld [vmem:[#allocation6 + $0x1b8] sm:$0xff]
          %v1190 = vld [vmem:[#allocation6 + $0x1c0] sm:$0xff]
          %v1191 = vld [vmem:[#allocation6 + $0x1c8] sm:$0xff]
          %v1192 = vld [vmem:[#allocation6 + $0x1d0] sm:$0xff]
          %v1193 = vld [vmem:[#allocation6 + $0x1d8] sm:$0xff]
          %v1194 = vld [vmem:[#allocation6 + $0x1e0] sm:$0xff]
          %v1195 = vld [vmem:[#allocation6 + $0x1e8] sm:$0xff]
          %v1196 = vld [vmem:[#allocation6 + $0x1f0] sm:$0xff]
          %v1197 = vld [vmem:[#allocation6 + $0x1f8] sm:$0xff]
          %v1198 = vld [vmem:[#allocation6 + $0x200] sm:$0xff]
          %v1199 = vld [vmem:[#allocation6 + $0x208] sm:$0xff]
          %v1200 = vld [vmem:[#allocation6 + $0x210] sm:$0xff]
          %v1201 = vld [vmem:[#allocation6 + $0x218] sm:$0xff]
          %v1202 = vld [vmem:[#allocation6 + $0x220] sm:$0xff]
          %v1203 = vld [vmem:[#allocation6 + $0x228] sm:$0xff]
          %v1204 = vld [vmem:[#allocation6 + $0x230] sm:$0xff]
          %v1205 = vld [vmem:[#allocation6 + $0x238] sm:$0xff]
          %v1206 = vld [vmem:[%s9] sm:$0x7]
          %v1208 = vlaneseq
          %v1209 = vshrl.u32 %v1208, 7
          %v1210 = vsub.s32 0, %v1209
          %v1211 = vrot.slane %v1206, %v1210
          %v1212 = vlaneseq
          %v1213 = vshrl.u32 %v1212, 7
          %v1214 = vsub.s32 1, %v1213
          %v1215 = vrot.slane %v1206, %v1214
          %v1216 = vlaneseq
          %v1217 = vshrl.u32 %v1216, 7
          %v1218 = vsub.s32 2, %v1217
          %v1219 = vrot.slane %v1206, %v1218
          %1223 = vmatprep.subr.bf16.mxu0 %v1135
          %1224 = vmatpush1.bf16.msra.mxu0 %v1134
          %1225 = vmatprep.subr.bf16.mxu0 %v1138
          %1226 = vmatpush1.bf16.msra.mxu0 %v1137
          %1227 = vmatprep.subr.bf16.mxu0 %v1141
          %1228 = vmatpush1.bf16.msra.mxu0 %v1140
          %1229 = vmatprep.subr.bf16.mxu0 %v1144
          %1230 = vmatpush1.bf16.msra.mxu0 %v1143
          %1231 = vmatprep.subr.bf16.mxu0 %v1147
          %1232 = vmatpush1.bf16.msra.mxu0 %v1146
          %1233 = vmatprep.subr.bf16.mxu0 %v1150
          %1234 = vmatpush1.bf16.msra.mxu0 %v1149
          %1235 = vmatprep.subr.bf16.mxu0 %v1153
          %1236 = vmatpush1.bf16.msra.mxu0 %v1152
          %1237 = vmatprep.subr.bf16.mxu0 %v1156
          %1238 = vmatpush1.bf16.msra.mxu0 %v1155
          %1239 = vmatprep.subr.bf16.mxu0 %v1159
          %1240 = vmatpush1.bf16.msra.mxu0 %v1158
          %1241 = vmatprep.subr.bf16.mxu0 %v1162
          %1242 = vmatpush1.bf16.msra.mxu0 %v1161
          %1243 = vmatprep.subr.bf16.mxu0 %v1165
          %1244 = vmatpush1.bf16.msra.mxu0 %v1164
          %1245 = vmatprep.subr.bf16.mxu0 %v1168
          %1246 = vmatpush1.bf16.msra.mxu0 %v1167
          %1247 = vmatprep.subr.bf16.mxu0 %v1171
          %1248 = vmatpush1.bf16.msra.mxu0 %v1170
          %1249 = vmatprep.subr.bf16.mxu0 %v1174
          %1250 = vmatpush1.bf16.msra.mxu0 %v1173
          %1251 = vmatprep.subr.bf16.mxu0 %v1177
          %1252 = vmatpush1.bf16.msra.mxu0 %v1176
          %1253 = vmatprep.subr.bf16.mxu0 %v1180
          %1254 = vmatpush1.bf16.msra.mxu0 %v1179
          %1255 = vmatprep.mubr.bf16.mxu0 %v1132
          %1256 = vmatmul.mubr.bf16.gmra.mrb[0].mxu0 %v1131
          %v1257 = vpop.f32.mrb[0].mxu0
          %v1258 = vadd.f32 %v1211, %v1257
          %v1259 = vpop.f32.mrb[0].mxu0
          %v1260 = vadd.f32 %v1215, %v1259
          %v1261 = vpop.f32.mrb[0].mxu0
          %v1262 = vpop.f32.mrb[0].mxu0
          %1263 = vdwg.mxu0
          %1264 = vmatprep.subr.bf16.mxu0 %v1183
          %1265 = vmatpush1.bf16.msra.mxu0 %v1182
          %1266 = vmatprep.subr.bf16.mxu0 %v1186
          %1267 = vmatpush1.bf16.msra.mxu0 %v1185
          %1268 = vmatprep.subr.bf16.mxu0 %v1189
          %1269 = vmatpush1.bf16.msra.mxu0 %v1188
          %1270 = vmatprep.subr.bf16.mxu0 %v1192
          %1271 = vmatpush1.bf16.msra.mxu0 %v1191
          %1272 = vmatprep.subr.bf16.mxu0 %v1195
          %1273 = vmatpush1.bf16.msra.mxu0 %v1194
          %1274 = vmatprep.subr.bf16.mxu0 %v1198
          %1275 = vmatpush1.bf16.msra.mxu0 %v1197
          %1276 = vmatprep.subr.bf16.mxu0 %v1201
          %1277 = vmatpush1.bf16.msra.mxu0 %v1200
          %1278 = vmatprep.subr.bf16.mxu0 %v1204
          %1279 = vmatpush1.bf16.msra.mxu0 %v1203
          %1280 = vmatprep.subr.bf16.mxu0 0
          %1281 = vmatpush1.bf16.msra.mxu0 0
          %1282 = vmatprep.subr.bf16.mxu0 0
          %1283 = vmatpush1.bf16.msra.mxu0 0
          %1284 = vmatprep.subr.bf16.mxu0 0
          %1285 = vmatpush1.bf16.msra.mxu0 0
          %1286 = vmatprep.subr.bf16.mxu0 0
          %1287 = vmatpush1.bf16.msra.mxu0 0
          %1288 = vmatprep.subr.bf16.mxu0 0
          %1289 = vmatpush1.bf16.msra.mxu0 0
          %1290 = vmatprep.subr.bf16.mxu0 0
          %1291 = vmatpush1.bf16.msra.mxu0 0
          %1292 = vmatprep.subr.bf16.mxu0 0
          %1293 = vmatpush1.bf16.msra.mxu0 0
          %1294 = vmatprep.subr.bf16.mxu0 0
          %1295 = vmatpush1.bf16.msra.mxu0 0
          %1296 = vmatprep.mubr.bf16.mxu0 0
          %1297 = vmatmul.mubr.bf16.gmra.mrb[0].mxu0 %v1133
          %v1298 = vpop.f32.mrb[0].mxu0
          %v1299 = vadd.f32 %v1258, %v1298
          %v1300 = vpop.f32.mrb[0].mxu0
          %v1301 = vadd.f32 %v1260, %v1300
          %v1302 = vpop.f32.mrb[0].mxu0
          %v1303 = vpop.f32.mrb[0].mxu0
          %1304 = vdwg.mxu0
          %1305 = vmatprep.subr.bf16.mxu0 0
          %1306 = vmatpush1.bf16.msra.mxu0 %v1136
          %1307 = vmatprep.subr.bf16.mxu0 0
          %1308 = vmatpush1.bf16.msra.mxu0 %v1139
          %1309 = vmatprep.subr.bf16.mxu0 0
          %1310 = vmatpush1.bf16.msra.mxu0 %v1142
          %1311 = vmatprep.subr.bf16.mxu0 0
          %1312 = vmatpush1.bf16.msra.mxu0 %v1145
          %1313 = vmatprep.subr.bf16.mxu0 0
          %1314 = vmatpush1.bf16.msra.mxu0 %v1148
          %1315 = vmatprep.subr.bf16.mxu0 0
          %1316 = vmatpush1.bf16.msra.mxu0 %v1151
          %1317 = vmatprep.subr.bf16.mxu0 0
          %1318 = vmatpush1.bf16.msra.mxu0 %v1154
          %1319 = vmatprep.subr.bf16.mxu0 0
          %1320 = vmatpush1.bf16.msra.mxu0 %v1157
          %1321 = vmatprep.subr.bf16.mxu0 0
          %1322 = vmatpush1.bf16.msra.mxu0 %v1160
          %1323 = vmatprep.subr.bf16.mxu0 0
          %1324 = vmatpush1.bf16.msra.mxu0 %v1163
          %1325 = vmatprep.subr.bf16.mxu0 0
          %1326 = vmatpush1.bf16.msra.mxu0 %v1166
          %1327 = vmatprep.subr.bf16.mxu0 0
          %1328 = vmatpush1.bf16.msra.mxu0 %v1169
          %1329 = vmatprep.subr.bf16.mxu0 0
          %1330 = vmatpush1.bf16.msra.mxu0 %v1172
          %1331 = vmatprep.subr.bf16.mxu0 0
          %1332 = vmatpush1.bf16.msra.mxu0 %v1175
          %1333 = vmatprep.subr.bf16.mxu0 0
          %1334 = vmatpush1.bf16.msra.mxu0 %v1178
          %1335 = vmatprep.subr.bf16.mxu0 0
          %1336 = vmatpush1.bf16.msra.mxu0 %v1181
          %1337 = vmatprep.mubr.bf16.mxu0 %v1132
          %1338 = vmatmul.mubr.bf16.gmra.mrb[0].mxu0 %v1131
          %v1339 = vpop.f32.mrb[0].mxu0
          %v1340 = vadd.f32 %v1219, %v1339
          %v1341 = vpop.f32.mrb[0].mxu0
          %v1342 = vpop.f32.mrb[0].mxu0
          %v1343 = vpop.f32.mrb[0].mxu0
          %1344 = vdwg.mxu0
          %1345 = vmatprep.subr.bf16.mxu0 0
          %1346 = vmatpush1.bf16.msra.mxu0 %v1184
          %1347 = vmatprep.subr.bf16.mxu0 0
          %1348 = vmatpush1.bf16.msra.mxu0 %v1187
          %1349 = vmatprep.subr.bf16.mxu0 0
          %1350 = vmatpush1.bf16.msra.mxu0 %v1190
          %1351 = vmatprep.subr.bf16.mxu0 0
          %1352 = vmatpush1.bf16.msra.mxu0 %v1193
          %1353 = vmatprep.subr.bf16.mxu0 0
          %1354 = vmatpush1.bf16.msra.mxu0 %v1196
          %1355 = vmatprep.subr.bf16.mxu0 0
          %1356 = vmatpush1.bf16.msra.mxu0 %v1199
          %1357 = vmatprep.subr.bf16.mxu0 0
          %1358 = vmatpush1.bf16.msra.mxu0 %v1202
          %1359 = vmatprep.subr.bf16.mxu0 0
          %1360 = vmatpush1.bf16.msra.mxu0 %v1205
          %1361 = vmatprep.subr.bf16.mxu0 0
          %1362 = vmatpush1.bf16.msra.mxu0 0
          %1363 = vmatprep.subr.bf16.mxu0 0
          %1364 = vmatpush1.bf16.msra.mxu0 0
          %1365 = vmatprep.subr.bf16.mxu0 0
          %1366 = vmatpush1.bf16.msra.mxu0 0
          %1367 = vmatprep.subr.bf16.mxu0 0
          %1368 = vmatpush1.bf16.msra.mxu0 0
          %1369 = vmatprep.subr.bf16.mxu0 0
          %1370 = vmatpush1.bf16.msra.mxu0 0
          %1371 = vmatprep.subr.bf16.mxu0 0
          %1372 = vmatpush1.bf16.msra.mxu0 0
          %1373 = vmatprep.subr.bf16.mxu0 0
          %1374 = vmatpush1.bf16.msra.mxu0 0
          %1375 = vmatprep.subr.bf16.mxu0 0
          %1376 = vmatpush1.bf16.msra.mxu0 0
          %1377 = vmatprep.mubr.bf16.mxu0 0
          %1378 = vmatmul.mubr.bf16.gmra.mrb[0].mxu0 %v1133
          %v1379 = vpop.f32.mrb[0].mxu0
          %v1380 = vadd.f32 %v1340, %v1379
          %v1381 = vpop.f32.mrb[0].mxu0
          %v1382 = vpop.f32.mrb[0].mxu0
          %v1383 = vpop.f32.mrb[0].mxu0
          %1384 = vdwg.mxu0
          %v1385 = vmax.f32 %v1299, 0.0
          %v1386 = vmax.f32 %v1301, 0.0
          %v1387 = vmax.f32 %v1380, 0.0
          %v1388 = vpack.c.bf16 %v1385, %v1385
          %v1389 = vpack.c.bf16 %v1386, %v1386
          %v1390 = vpack.c.bf16 %v1387, %v1387
          %v1391 = vld [vmem:[#allocation10] sm:$0xf]
          %v1392 = vld [vmem:[#allocation10 + $0x4] sm:$0xf]
          %v1393 = vld [vmem:[#allocation10 + $0x8] sm:$0xf]
          %v1394 = vld [vmem:[#allocation10 + $0xc] sm:$0xf]
          %v1395 = vld [vmem:[#allocation10 + $0x10] sm:$0xf]
          %v1396 = vld [vmem:[#allocation10 + $0x14] sm:$0xf]
          %v1397 = vld [vmem:[#allocation10 + $0x18] sm:$0xf]
          %v1398 = vld [vmem:[#allocation10 + $0x1c] sm:$0xf]
          %v1399 = vld [vmem:[#allocation10 + $0x20] sm:$0xf]
          %v1400 = vld [vmem:[#allocation10 + $0x24] sm:$0xf]
          %v1401 = vld [vmem:[#allocation10 + $0x28] sm:$0xf]
          %v1402 = vld [vmem:[#allocation10 + $0x2c] sm:$0xf]
          %v1403 = vld [vmem:[#allocation10 + $0x30] sm:$0xf]
          %v1404 = vld [vmem:[#allocation10 + $0x34] sm:$0xf]
          %v1405 = vld [vmem:[#allocation10 + $0x38] sm:$0xf]
          %v1406 = vld [vmem:[#allocation10 + $0x3c] sm:$0xf]
          %v1407 = vld [vmem:[#allocation10 + $0x40] sm:$0xf]
          %v1408 = vld [vmem:[#allocation10 + $0x44] sm:$0xf]
          %v1409 = vld [vmem:[#allocation10 + $0x48] sm:$0xf]
          %v1410 = vld [vmem:[#allocation10 + $0x4c] sm:$0xf]
          %v1411 = vld [vmem:[#allocation10 + $0x50] sm:$0xf]
          %v1412 = vld [vmem:[#allocation10 + $0x54] sm:$0xf]
          %v1413 = vld [vmem:[#allocation10 + $0x58] sm:$0xf]
          %v1414 = vld [vmem:[#allocation10 + $0x5c] sm:$0xf]
          %v1415 = vld [vmem:[#allocation10 + $0x60] sm:$0xf]
          %v1416 = vld [vmem:[#allocation10 + $0x64] sm:$0xf]
          %v1417 = vld [vmem:[#allocation10 + $0x68] sm:$0xf]
          %v1418 = vld [vmem:[#allocation10 + $0x6c] sm:$0xf]
          %v1419 = vld [vmem:[#allocation10 + $0x70] sm:$0xf]
          %v1420 = vld [vmem:[#allocation10 + $0x74] sm:$0xf]
          %v1421 = vld [vmem:[#allocation10 + $0x78] sm:$0xf]
          %v1422 = vld [vmem:[#allocation10 + $0x7c] sm:$0xf]
          %v1423 = vld [vmem:[#allocation10 + $0x80] sm:$0xf]
          %v1424 = vld [vmem:[#allocation10 + $0x84] sm:$0xf]
          %v1425 = vld [vmem:[#allocation10 + $0x88] sm:$0xf]
          %v1426 = vld [vmem:[#allocation10 + $0x8c] sm:$0xf]
          %v1427 = vld [vmem:[#allocation10 + $0x90] sm:$0xf]
          %v1428 = vld [vmem:[#allocation10 + $0x94] sm:$0xf]
          %v1429 = vld [vmem:[#allocation10 + $0x98] sm:$0xf]
          %v1430 = vld [vmem:[#allocation10 + $0x9c] sm:$0xf]
          %v1431 = vld [vmem:[#allocation10 + $0xa0] sm:$0xf]
          %v1432 = vld [vmem:[#allocation10 + $0xa4] sm:$0xf]
          %v1433 = vld [vmem:[#allocation10 + $0xa8] sm:$0xf]
          %v1434 = vld [vmem:[#allocation10 + $0xac] sm:$0xf]
          %v1435 = vld [vmem:[#allocation10 + $0xb0] sm:$0xf]
          %v1436 = vld [vmem:[#allocation10 + $0xb4] sm:$0xf]
          %v1437 = vld [vmem:[#allocation10 + $0xb8] sm:$0xf]
          %v1438 = vld [vmem:[#allocation10 + $0xbc] sm:$0xf]
          %v1439 = vld [vmem:[%s11] sm:$0x1]
          %v1441 = vlaneseq
          %v1442 = vshrl.u32 %v1441, 7
          %v1443 = vsub.s32 0, %v1442
          %v1444 = vrot.slane %v1439, %v1443
          %v1494 = vunpack.c.l.b16 %v1391
          %v1495 = vunpack.c.l.b16 %v1392
          %v1496 = vunpack.c.l.b16 %v1393
          %v1497 = vunpack.c.l.b16 %v1394
          %v1498 = vunpack.c.l.b16 %v1395
          %v1499 = vunpack.c.l.b16 %v1396
          %v1500 = vunpack.c.l.b16 %v1397
          %v1501 = vunpack.c.l.b16 %v1398
          %v1502 = vunpack.c.l.b16 %v1399
          %v1503 = vunpack.c.l.b16 %v1400
          %v1504 = vunpack.c.l.b16 %v1401
          %v1505 = vunpack.c.l.b16 %v1402
          %v1506 = vunpack.c.l.b16 %v1403
          %v1507 = vunpack.c.l.b16 %v1404
          %v1508 = vunpack.c.l.b16 %v1405
          %v1509 = vunpack.c.l.b16 %v1406
          %v1510 = vunpack.c.l.b16 %v1407
          %v1511 = vunpack.c.l.b16 %v1408
          %v1512 = vunpack.c.l.b16 %v1409
          %v1513 = vunpack.c.l.b16 %v1410
          %v1514 = vunpack.c.l.b16 %v1411
          %v1515 = vunpack.c.l.b16 %v1412
          %v1516 = vunpack.c.l.b16 %v1413
          %v1517 = vunpack.c.l.b16 %v1414
          %v1518 = vunpack.c.l.b16 %v1415
          %v1519 = vunpack.c.l.b16 %v1416
          %v1520 = vunpack.c.l.b16 %v1417
          %v1521 = vunpack.c.l.b16 %v1418
          %v1522 = vunpack.c.l.b16 %v1419
          %v1523 = vunpack.c.l.b16 %v1420
          %v1524 = vunpack.c.l.b16 %v1421
          %v1525 = vunpack.c.l.b16 %v1422
          %v1526 = vunpack.c.l.b16 %v1423
          %v1527 = vunpack.c.l.b16 %v1424
          %v1528 = vunpack.c.l.b16 %v1425
          %v1529 = vunpack.c.l.b16 %v1426
          %v1530 = vunpack.c.l.b16 %v1427
          %v1531 = vunpack.c.l.b16 %v1428
          %v1532 = vunpack.c.l.b16 %v1429
          %v1533 = vunpack.c.l.b16 %v1430
          %v1534 = vunpack.c.l.b16 %v1431
          %v1535 = vunpack.c.l.b16 %v1432
          %v1536 = vunpack.c.l.b16 %v1433
          %v1537 = vunpack.c.l.b16 %v1434
          %v1538 = vunpack.c.l.b16 %v1435
          %v1539 = vunpack.c.l.b16 %v1436
          %v1540 = vunpack.c.l.b16 %v1437
          %v1541 = vunpack.c.l.b16 %v1438
          %v1542 = vpack.c.b16 %v1495, %v1494
          %v1543 = vpack.c.b16 %v1497, %v1496
          %v1544 = vpack.c.b16 %v1499, %v1498
          %v1545 = vpack.c.b16 %v1501, %v1500
          %v1546 = vpack.c.b16 %v1503, %v1502
          %v1547 = vpack.c.b16 %v1505, %v1504
          %v1548 = vpack.c.b16 %v1507, %v1506
          %v1549 = vpack.c.b16 %v1509, %v1508
          %v1550 = vpack.c.b16 %v1511, %v1510
          %v1551 = vpack.c.b16 %v1513, %v1512
          %v1552 = vpack.c.b16 %v1515, %v1514
          %v1553 = vpack.c.b16 %v1517, %v1516
          %v1554 = vpack.c.b16 %v1519, %v1518
          %v1555 = vpack.c.b16 %v1521, %v1520
          %v1556 = vpack.c.b16 %v1523, %v1522
          %v1557 = vpack.c.b16 %v1525, %v1524
          %v1558 = vpack.c.b16 %v1527, %v1526
          %v1559 = vpack.c.b16 %v1529, %v1528
          %v1560 = vpack.c.b16 %v1531, %v1530
          %v1561 = vpack.c.b16 %v1533, %v1532
          %v1562 = vpack.c.b16 %v1535, %v1534
          %v1563 = vpack.c.b16 %v1537, %v1536
          %v1564 = vpack.c.b16 %v1539, %v1538
          %v1565 = vpack.c.b16 %v1541, %v1540
          %1590 = vmatprep.subr.bf16.mxu0 0
          %1591 = vmatpush1.bf16.msra.mxu0 %v1542
          %1592 = vmatprep.subr.bf16.mxu0 0
          %1593 = vmatpush1.bf16.msra.mxu0 %v1543
          %1594 = vmatprep.subr.bf16.mxu0 0
          %1595 = vmatpush1.bf16.msra.mxu0 %v1544
          %1596 = vmatprep.subr.bf16.mxu0 0
          %1597 = vmatpush1.bf16.msra.mxu0 %v1545
          %1598 = vmatprep.subr.bf16.mxu0 0
          %1599 = vmatpush1.bf16.msra.mxu0 %v1546
          %1600 = vmatprep.subr.bf16.mxu0 0
          %1601 = vmatpush1.bf16.msra.mxu0 %v1547
          %1602 = vmatprep.subr.bf16.mxu0 0
          %1603 = vmatpush1.bf16.msra.mxu0 %v1548
          %1604 = vmatprep.subr.bf16.mxu0 0
          %1605 = vmatpush1.bf16.msra.mxu0 %v1549
          %1606 = vmatprep.subr.bf16.mxu0 0
          %1607 = vmatpush1.bf16.msra.mxu0 %v1550
          %1608 = vmatprep.subr.bf16.mxu0 0
          %1609 = vmatpush1.bf16.msra.mxu0 %v1551
          %1610 = vmatprep.subr.bf16.mxu0 0
          %1611 = vmatpush1.bf16.msra.mxu0 %v1552
          %1612 = vmatprep.subr.bf16.mxu0 0
          %1613 = vmatpush1.bf16.msra.mxu0 %v1553
          %1614 = vmatprep.subr.bf16.mxu0 0
          %1615 = vmatpush1.bf16.msra.mxu0 %v1554
          %1616 = vmatprep.subr.bf16.mxu0 0
          %1617 = vmatpush1.bf16.msra.mxu0 %v1555
          %1618 = vmatprep.subr.bf16.mxu0 0
          %1619 = vmatpush1.bf16.msra.mxu0 %v1556
          %1620 = vmatprep.subr.bf16.mxu0 0
          %1621 = vmatpush1.bf16.msra.mxu0 %v1557
          %1622 = vmatprep.mubr.bf16.mxu0 %v1389
          %1623 = vmatmul.mubr.bf16.gmra.mrb[0].mxu0 %v1388
          %v1624 = vpop.f32.mrb[0].mxu0
          %v1625 = vadd.f32 %v1444, %v1624
          %v1626 = vpop.f32.mrb[0].mxu0
          %v1627 = vpop.f32.mrb[0].mxu0
          %v1628 = vpop.f32.mrb[0].mxu0
          %1629 = vdwg.mxu0
          %1630 = vmatprep.subr.bf16.mxu0 0
          %1631 = vmatpush1.bf16.msra.mxu0 %v1558
          %1632 = vmatprep.subr.bf16.mxu0 0
          %1633 = vmatpush1.bf16.msra.mxu0 %v1559
          %1634 = vmatprep.subr.bf16.mxu0 0
          %1635 = vmatpush1.bf16.msra.mxu0 %v1560
          %1636 = vmatprep.subr.bf16.mxu0 0
          %1637 = vmatpush1.bf16.msra.mxu0 %v1561
          %1638 = vmatprep.subr.bf16.mxu0 0
          %1639 = vmatpush1.bf16.msra.mxu0 %v1562
          %1640 = vmatprep.subr.bf16.mxu0 0
          %1641 = vmatpush1.bf16.msra.mxu0 %v1563
          %1642 = vmatprep.subr.bf16.mxu0 0
          %1643 = vmatpush1.bf16.msra.mxu0 %v1564
          %1644 = vmatprep.subr.bf16.mxu0 0
          %1645 = vmatpush1.bf16.msra.mxu0 %v1565
          %1646 = vmatprep.subr.bf16.mxu0 0
          %1647 = vmatpush1.bf16.msra.mxu0 0
          %1648 = vmatprep.subr.bf16.mxu0 0
          %1649 = vmatpush1.bf16.msra.mxu0 0
          %1650 = vmatprep.subr.bf16.mxu0 0
          %1651 = vmatpush1.bf16.msra.mxu0 0
          %1652 = vmatprep.subr.bf16.mxu0 0
          %1653 = vmatpush1.bf16.msra.mxu0 0
          %1654 = vmatprep.subr.bf16.mxu0 0
          %1655 = vmatpush1.bf16.msra.mxu0 0
          %1656 = vmatprep.subr.bf16.mxu0 0
          %1657 = vmatpush1.bf16.msra.mxu0 0
          %1658 = vmatprep.subr.bf16.mxu0 0
          %1659 = vmatpush1.bf16.msra.mxu0 0
          %1660 = vmatprep.subr.bf16.mxu0 0
          %1661 = vmatpush1.bf16.msra.mxu0 0
          %1662 = vmatprep.mubr.bf16.mxu0 0
          %1663 = vmatmul.mubr.bf16.gmra.mrb[0].mxu0 %v1390
          %v1664 = vpop.f32.mrb[0].mxu0
          %v1665 = vadd.f32 %v1625, %v1664
          %v1666 = vpop.f32.mrb[0].mxu0
          %v1667 = vpop.f32.mrb[0].mxu0
          %v1668 = vpop.f32.mrb[0].mxu0
          %1669 = vdwg.mxu0
          %1670 = vst [vmem:[%s12] sm:$0xff] %v1665
        $region106: #{baseline_model_forward.1} parent=55 // pred_fallthru
          _
        // Predicated region
        $region107: #{baseline_model_forward.1} parent=55 // pred_check
          %p1671 = pneg %p239
        $region108: #{baseline_model_forward.1} parent=55 // pred_check_branch
          %1673 = sbr.rel (%p1671) target = $region110
        $region109: #{baseline_model_forward.1} parent=55 // pred_region
          _
        $region110: #{baseline_model_forward.1} parent=55 // pred_fallthru
          _
        // Predicated region
        $region111: #{baseline_model_forward.1} parent=55 // pred_check
          %p1674 = pneg %p239
        $region112: #{baseline_model_forward.1} parent=55 // pred_check_branch
          %1676 = sbr.rel (%p1674) target = $region114
        $region113: #{baseline_model_forward.1} parent=55 // pred_region
          _
        $region114: #{baseline_model_forward.1} parent=55 // pred_fallthru
          _
      $region56: #{baseline_model_forward.1} parent=5 // pred_fallthru
        _
      %p1677 = scmp.le.s32.totalorder 2, %s22
      // Predicated region
      $region115: #{baseline_model_forward.1} parent=5 // pred_check
        %p1678 = pneg %p1677
      $region116: #{baseline_model_forward.1} parent=5 // pred_check_branch
        %1680 = sbr.rel (%p1678) target = $region118
      $region117: #{baseline_model_forward.1} parent=5 // pred_region
        %s1681 = ssub.s32 %s22, 2
      $region118: #{baseline_model_forward.1} parent=5 // pred_fallthru
        _
    $region6: #{baseline_model_forward.1} parent=1 // loop_footer
      %s26 = sadd.s32 1, %s22
    $region7: #{baseline_model_forward.1} parent=1 // loop_footer_branch
      %21 = sbr.rel target = $region3
    $region8: #{baseline_model_forward.1} parent=1 // loop_exit
      _
    %1682 = vsyncpa [#allocation9], 1
    %s1683 = scalar_lea.sflag [#allocation9], 1
    %1684 = vsyncpa %s1683, 1
    %1685 = vsyncpa [#allocation11], 1
  %1686 = vsyncmov [#allocation7]
  %s1687 = vpop.sfrf %1686
  %p1688 = scmp.eq.s32.totalorder %s1687, 0
  %p1689 = pneg %p1688
  %1691 = shalt.err (%p1689)
  %s1692 = scalar_lea.sflag [#allocation7], 1
  %1693 = vsyncmov %s1692
  %s1694 = vpop.sfrf %1693
  %p1695 = scmp.eq.s32.totalorder %s1694, 0
  %p1696 = pneg %p1695
  %1698 = shalt.err (%p1696)
  %s1699 = scalar_lea.sflag [#allocation7], 2
  %1700 = vsyncmov %s1699
  %s1701 = vpop.sfrf %1700
  %p1702 = scmp.eq.s32.totalorder %s1701, 0
  %p1703 = pneg %p1702
  %1705 = shalt.err (%p1703)

</llo_original>
